<compile_context>
chip_gen: v5e
topology: v5e:2x2
jax: 0.10.0
libtpu: 0.0.40
codegen_flags: <defaults>
</compile_context>

<pallas_src>
import functools

import jax
import jax.numpy as jnp
from jax.experimental import pallas as pl
from jax.experimental.pallas import tpu as pltpu

LANE = 128


def _round_up(x, m):
    return (x + m - 1) // m * m


def _sigmoid_f32(z):
    # tanh form: one EUP op instead of exp + add + full-precision divide.
    return 0.5 * jnp.tanh(0.5 * z) + 0.5


def _vmem_budget_bytes():
    """Per-chip VMEM budget (with headroom) for the resident-weights design."""
    cap = None
    try:
        cap = getattr(pltpu.get_tpu_info(), "vmem_capacity_bytes", None)
    except Exception:
        cap = None
    if not cap:
        cap = 64 * 1024 * 1024  # conservative default (v7x per-TC VMEM)
    return int(cap) * 3 // 4


# --------------------------------------------------------------------------
# Kernels
# --------------------------------------------------------------------------
def dnn_mlp_kernel_resident(x_ref,
                            w1_ref, b1_ref,
                            w2_ref, b2_ref,
                            w3_ref, b3_ref,
                            w4_ref, b4_ref,
                            w5_ref, b5_ref,
                            o_ref):
    """Whole 5-layer MLP for one batch tile; all weights VMEM-resident.

    bf16 MXU inputs, f32 accumulation / bias add / sigmoid, f32 logits out.
    """
    h = x_ref[...]  # bf16 (TB, D0p)
    for w_ref, b_ref, is_last in (
            (w1_ref, b1_ref, False),
            (w2_ref, b2_ref, False),
            (w3_ref, b3_ref, False),
            (w4_ref, b4_ref, False),
            (w5_ref, b5_ref, True)):
        acc = jnp.dot(h, w_ref[...], preferred_element_type=jnp.float32)
        acc = acc + b_ref[...]                      # f32 bias add (VPU)
        if is_last:
            o_ref[...] = acc                        # raw logits, lane-dense
        else:
            h = _sigmoid_f32(acc).astype(jnp.bfloat16)


def dnn_mlp_kernel_streamed(x_ref,
                            w1_ref, b1_ref,
                            w2_ref, b2_ref,
                            b3_ref, w3_hbm,
                            b4_ref, w4_hbm,
                            w5_ref, b5_ref,
                            o_ref,
                            wbuf3, wbuf4, sem, h3_ref, h4_ref):
    """Layers 1, 2, 5 VMEM-resident; W3/W4 streamed from HBM in column chunks
    with manual double-buffered DMA (v7x / large-`a` fallback)."""
    tn3 = wbuf3.shape[-1]
    tn4 = wbuf4.shape[-1]
    n3 = h3_ref.shape[-1] // tn3   # static Python ints
    n4 = h4_ref.shape[-1] // tn4

    # Layers 1-2 (resident weights).
    h = _sigmoid_f32(jnp.dot(x_ref[...], w1_ref[...],
                             preferred_element_type=jnp.float32)
                     + b1_ref[...]).astype(jnp.bfloat16)
    h2 = _sigmoid_f32(jnp.dot(h, w2_ref[...],
                              preferred_element_type=jnp.float32)
                      + b2_ref[...]).astype(jnp.bfloat16)

    def w3_copy(j, slot):
        return pltpu.make_async_copy(
            w3_hbm.at[:, j * tn3:(j + 1) * tn3], wbuf3.at[slot], sem.at[0, slot])

    def w4_copy(j, slot):
        return pltpu.make_async_copy(
            w4_hbm.at[:, j * tn4:(j + 1) * tn4], wbuf4.at[slot], sem.at[1, slot])

    # Layer 3: stream W3 column chunks (static unroll -> all slice starts are
    # compile-time constants; chunk j+1 DMA overlaps chunk j matmul).
    w3_copy(0, 0).start()
    for j in range(n3):
        slot = j % 2
        w3_copy(j, slot).wait()
        if j + 1 < n3:
            w3_copy(j + 1, 1 - slot).start()
        else:
            w4_copy(0, 0).start()   # prefetch first W4 chunk under last W3 matmul
        acc = jnp.dot(h2, wbuf3[slot], preferred_element_type=jnp.float32)
        acc = acc + b3_ref[:, j * tn3:(j + 1) * tn3]
        h3_ref[:, j * tn3:(j + 1) * tn3] = _sigmoid_f32(acc).astype(jnp.bfloat16)

    # Layer 4: stream W4 column chunks.
    h3 = h3_ref[...]
    for j in range(n4):
        slot = j % 2
        w4_copy(j, slot).wait()
        if j + 1 < n4:
            w4_copy(j + 1, 1 - slot).start()
        acc = jnp.dot(h3, wbuf4[slot], preferred_element_type=jnp.float32)
        acc = acc + b4_ref[:, j * tn4:(j + 1) * tn4]
        h4_ref[:, j * tn4:(j + 1) * tn4] = _sigmoid_f32(acc).astype(jnp.bfloat16)

    # Layer 5 (resident): raw logits in f32.
    o_ref[...] = (jnp.dot(h4_ref[...], w5_ref[...],
                          preferred_element_type=jnp.float32) + b5_ref[...])


# --------------------------------------------------------------------------
# Host-side wrappers
# --------------------------------------------------------------------------
def prepare_padded_params(params):
    """One-time weight prep (outside the per-step jit): zero-pad every feature
    dim to a multiple of 128 lanes, cast weights to bf16 and biases to f32.

    Returns (padded_weights, padded_biases, dims) where dims are the original
    (unpadded) layer widths.  Padded regions are exactly zero.
    """
    dims = [params[0][0].shape[0]] + [w.shape[1] for (w, _) in params]
    pdims = [_round_up(d, LANE) for d in dims]
    pws, pbs = [], []
    for li, (w, b) in enumerate(params):
        din, dout = w.shape
        pin, pout = pdims[li], pdims[li + 1]
        wp = jnp.zeros((pin, pout), jnp.bfloat16)
        wp = wp.at[:din, :dout].set(jnp.asarray(w, jnp.bfloat16))
        bp = jnp.zeros((1, pout), jnp.float32)
        bp = bp.at[:, :dout].set(jnp.asarray(b, jnp.float32).reshape(1, dout))
        pws.append(wp)
        pbs.append(bp)
    return pws, pbs, tuple(dims)


def dnn_forward(x, padded_weights, padded_biases, *, dims, batch_tile=256,
                force_stream=False, stream_tn=None):
    """x: (batch, input_size) f32.  padded_weights/biases from
    prepare_padded_params.  dims: original layer widths (static tuple)."""
    batch, in_dim = x.shape
    assert in_dim == dims[0], (in_dim, dims)
    out_dim = dims[-1]
    pdims = [_round_up(d, LANE) for d in dims]
    n_layers = len(padded_weights)

    # Batch tile: 256-aligned (fills the MXU, amortizes per-step overhead),
    # split so v7x megacore gets >= 2 grid steps once pbatch >= 512.
    tb = _round_up(min(batch_tile, max(batch, 1)), 256)
    pbatch = _round_up(batch, tb)
    if pbatch >= 512 and pbatch // tb < 2:
        tb = _round_up((pbatch + 1) // 2, 256)
        pbatch = _round_up(batch, tb)
    num_tiles = pbatch // tb

    # Byte accounting -> VMEM limit + residency decision.
    w_bytes = [int(w.size) * w.dtype.itemsize for w in padded_weights]
    b_bytes = [int(b.size) * b.dtype.itemsize for b in padded_biases]
    io_tile_bytes = 2 * tb * pdims[0] * 2 + 2 * tb * pdims[-1] * 4  # dbl-buf x/out
    headroom = 16 << 20
    budget = _vmem_budget_bytes()
    resident_need = sum(w_bytes) + sum(b_bytes) + io_tile_bytes + headroom
    stream_heavy = force_stream or resident_need > budget

    # Pad x (per-call data; weights were padded offline).
    xp = jnp.zeros((pbatch, pdims[0]), jnp.bfloat16)
    xp = xp.at[:batch, :in_dim].set(x.astype(jnp.bfloat16))

    const0 = lambda i: (0, 0)

    def w_spec(li):
        # Constant index_map + single buffer: DMA'd once, VMEM-resident.
        return pl.BlockSpec((pdims[li], pdims[li + 1]), const0,
                            pipeline_mode=pl.Buffered(1))

    def b_spec(li):
        return pl.BlockSpec((1, pdims[li + 1]), const0,
                            pipeline_mode=pl.Buffered(1))

    x_spec = pl.BlockSpec((tb, pdims[0]), lambda i: (i, 0))
    o_spec = pl.BlockSpec((tb, pdims[-1]), lambda i: (i, 0))

    flops = 2 * pbatch * sum(pdims[i] * pdims[i + 1] for i in range(n_layers))
    transcendentals = pbatch * sum(pdims[1:n_layers])

    if not stream_heavy:
        flat_args = [xp]
        in_specs = [x_spec]
        for li in range(n_layers):
            flat_args += [padded_weights[li], padded_biases[li]]
            in_specs += [w_spec(li), b_spec(li)]
        kernel = dnn_mlp_kernel_resident
        scratch_shapes = ()
        vmem_limit = int(max(32 << 20, min(budget, resident_need)))
        bytes_accessed = (xp.size * 2 + pbatch * pdims[-1] * 4
                          + sum(w_bytes) + sum(b_bytes))
    else:
        # Stream the two heavy layers (W3: 2a x 4a, W4: 4a x 4a) from HBM.
        if stream_tn is None:
            stream_tn = next(c for c in (512, 256, 128)
                             if pdims[3] % c == 0 and pdims[4] % c == 0)
        assert stream_tn % LANE == 0
        assert pdims[3] % stream_tn == 0 and pdims[4] % stream_tn == 0
        flat_args = [xp,
                     padded_weights[0], padded_biases[0],
                     padded_weights[1], padded_biases[1],
                     padded_biases[2], padded_weights[2],
                     padded_biases[3], padded_weights[3],
                     padded_weights[4], padded_biases[4]]
        in_specs = [x_spec,
                    w_spec(0), b_spec(0),
                    w_spec(1), b_spec(1),
                    b_spec(2), pl.BlockSpec(memory_space=pl.ANY),   # W3 in HBM
                    b_spec(3), pl.BlockSpec(memory_space=pl.ANY),   # W4 in HBM
                    w_spec(4), b_spec(4)]
        kernel = dnn_mlp_kernel_streamed
        scratch_shapes = (
            pltpu.VMEM((2, pdims[2], stream_tn), jnp.bfloat16),  # W3 chunk dbl-buf
            pltpu.VMEM((2, pdims[3], stream_tn), jnp.bfloat16),  # W4 chunk dbl-buf
            pltpu.SemaphoreType.DMA((2, 2)),
            pltpu.VMEM((tb, pdims[3]), jnp.bfloat16),            # h3
            pltpu.VMEM((tb, pdims[4]), jnp.bfloat16),            # h4
        )
        resident_small = w_bytes[0] + w_bytes[1] + w_bytes[4] + sum(b_bytes)
        scratch_bytes = (2 * pdims[2] * stream_tn * 2 + 2 * pdims[3] * stream_tn * 2
                         + tb * pdims[3] * 2 + tb * pdims[4] * 2)
        vmem_limit = int(max(32 << 20,
                             min(budget, resident_small + scratch_bytes
                                 + io_tile_bytes + headroom)))
        bytes_accessed = (xp.size * 2 + pbatch * pdims[-1] * 4 + resident_small
                          + num_tiles * (w_bytes[2] + w_bytes[3]))

    out_padded = pl.pallas_call(
        kernel,
        out_shape=jax.ShapeDtypeStruct((pbatch, pdims[-1]), jnp.float32),
        grid=(num_tiles,),
        in_specs=in_specs,
        out_specs=o_spec,
        scratch_shapes=scratch_shapes,
        compiler_params=pltpu.CompilerParams(
            dimension_semantics=("parallel",),
            vmem_limit_bytes=vmem_limit),
        cost_estimate=pl.CostEstimate(
            flops=int(flops),
            transcendentals=int(transcendentals),
            bytes_accessed=int(bytes_accessed)),
    )(*flat_args)

    return out_padded[:batch, :out_dim]


# --------------------------------------------------------------------------
# Reference / parameter construction
# --------------------------------------------------------------------------
def make_params(key, input_size, output_size):
    """Xavier-normal weights (matches _initialize_weights), zero biases."""
    a = input_size
    dims = [a, 2 * a, 2 * a, 4 * a, 4 * a, output_size]
    params = []
    for i in range(5):
        fan_in, fan_out = dims[i], dims[i + 1]
        key, sub = jax.random.split(key)
        std = (2.0 / (fan_in + fan_out)) ** 0.5
        w = std * jax.random.normal(sub, (fan_in, fan_out), dtype=jnp.float32)
        b = jnp.zeros((1, fan_out), dtype=jnp.float32)
        params.append((w, b))
    return params


def dnn_forward_ref(x, params):
    h = x
    for i, (w, b) in enumerate(params):
        h = h @ w + b
        if i < len(params) - 1:
            h = jax.nn.sigmoid(h)
    return h


if __name__ == "__main__":
    root = jax.random.PRNGKey(0)

    def run_case(case_key, input_size, output_size, batch, **fwd_kw):
        kx, kp = jax.random.split(case_key)
        x = jax.random.normal(kx, (batch, input_size), dtype=jnp.float32)
        params = make_params(kp, input_size, output_size)
        pws, pbs, dims = prepare_padded_params(params)   # one-time weight prep
        fwd = jax.jit(functools.partial(dnn_forward, dims=dims, **fwd_kw))
        out = fwd(x, pws, pbs)
        jax.block_until_ready(out)
        ref = dnn_forward_ref(x, params)
        assert out.shape == (batch, output_size), out.shape
        err = float(jnp.max(jnp.abs(out - ref)))
        # bf16 MXU inputs (f32 accumulation) -> looser tolerance than pure f32.
        assert jnp.allclose(out, ref, atol=2e-2, rtol=2e-2), err

    k1, k2 = jax.random.split(root)
    # 1) Default path: all weights VMEM-resident (small model).
    run_case(k1, input_size=32, output_size=1, batch=8)
    # 2) Large-`a` fallback (v7x VMEM) forced on a small model so the W3/W4
    #    streaming path is also compiled, run and checked on-device.
    run_case(k2, input_size=64, output_size=1, batch=32,
             force_stream=True, stream_tn=128)

    print("KERNEL_OK")
</pallas_src>

<mosaic_0001>
module attributes {stable_mosaic.version = 11 : i64} {
  func.func @dnn_mlp_kernel_resident(%arg0: i32, %arg1: memref<256x128xbf16, #tpu.memory_space<vmem>>, %arg2: memref<128x128xbf16, #tpu.memory_space<vmem>>, %arg3: memref<1x128xf32, #tpu.memory_space<vmem>>, %arg4: memref<128x128xbf16, #tpu.memory_space<vmem>>, %arg5: memref<1x128xf32, #tpu.memory_space<vmem>>, %arg6: memref<128x128xbf16, #tpu.memory_space<vmem>>, %arg7: memref<1x128xf32, #tpu.memory_space<vmem>>, %arg8: memref<128x128xbf16, #tpu.memory_space<vmem>>, %arg9: memref<1x128xf32, #tpu.memory_space<vmem>>, %arg10: memref<128x128xbf16, #tpu.memory_space<vmem>>, %arg11: memref<1x128xf32, #tpu.memory_space<vmem>>, %arg12: memref<256x128xf32, #tpu.memory_space<vmem>>) attributes {dimension_semantics = [#tpu.dimension_semantics<parallel>], iteration_bounds = array<i64: 1>, scalar_prefetch = 0 : i64, scratch_operands = 0 : i64, tpu.core_type = #tpu.core_type<tc>, window_params = [{transform_indices = @transform_0, window_bounds = array<i64: 256, 128>}, {pipeline_mode = #tpu.pipeline_mode<synchronous>, transform_indices = @transform_1, window_bounds = array<i64: 128, 128>}, {pipeline_mode = #tpu.pipeline_mode<synchronous>, transform_indices = @transform_2, window_bounds = array<i64: 1, 128>}, {pipeline_mode = #tpu.pipeline_mode<synchronous>, transform_indices = @transform_3, window_bounds = array<i64: 128, 128>}, {pipeline_mode = #tpu.pipeline_mode<synchronous>, transform_indices = @transform_4, window_bounds = array<i64: 1, 128>}, {pipeline_mode = #tpu.pipeline_mode<synchronous>, transform_indices = @transform_5, window_bounds = array<i64: 128, 128>}, {pipeline_mode = #tpu.pipeline_mode<synchronous>, transform_indices = @transform_6, window_bounds = array<i64: 1, 128>}, {pipeline_mode = #tpu.pipeline_mode<synchronous>, transform_indices = @transform_7, window_bounds = array<i64: 128, 128>}, {pipeline_mode = #tpu.pipeline_mode<synchronous>, transform_indices = @transform_8, window_bounds = array<i64: 1, 128>}, {pipeline_mode = #tpu.pipeline_mode<synchronous>, transform_indices = @transform_9, window_bounds = array<i64: 128, 128>}, {pipeline_mode = #tpu.pipeline_mode<synchronous>, transform_indices = @transform_10, window_bounds = array<i64: 1, 128>}, {transform_indices = @transform_11, window_bounds = array<i64: 256, 128>}]} {
    %c0 = arith.constant 0 : index
    %c0_0 = arith.constant 0 : index
    %0 = vector.load %arg1[%c0, %c0_0] : memref<256x128xbf16, #tpu.memory_space<vmem>>, vector<256x128xbf16>
    %c0_1 = arith.constant 0 : index
    %c0_2 = arith.constant 0 : index
    %1 = vector.load %arg2[%c0_1, %c0_2] : memref<128x128xbf16, #tpu.memory_space<vmem>>, vector<128x128xbf16>
    %cst = arith.constant dense<0.000000e+00> : vector<256x128xf32>
    %2 = tpu.matmul %0, %1, %cst {dimension_numbers = #tpu.dot_dimension_numbers<[1], [0], [0], [1], [0, 0, 1, 1], [], []>} : vector<256x128xbf16>, vector<128x128xbf16>, vector<256x128xf32> -> vector<256x128xf32>
    %c0_3 = arith.constant 0 : index
    %c0_4 = arith.constant 0 : index
    %3 = vector.load %arg3[%c0_3, %c0_4] : memref<1x128xf32, #tpu.memory_space<vmem>>, vector<1x128xf32>
    %4 = vector.broadcast %3 : vector<1x128xf32> to vector<256x128xf32>
    %5 = arith.addf %2, %4 : vector<256x128xf32>
    %cst_5 = arith.constant 5.000000e-01 : f32
    %6 = vector.broadcast %cst_5 : f32 to vector<256x128xf32>
    %7 = arith.mulf %6, %5 : vector<256x128xf32>
    %8 = math.tanh %7 : vector<256x128xf32>
    %cst_6 = arith.constant 5.000000e-01 : f32
    %9 = vector.broadcast %cst_6 : f32 to vector<256x128xf32>
    %10 = arith.mulf %9, %8 : vector<256x128xf32>
    %cst_7 = arith.constant 5.000000e-01 : f32
    %11 = vector.broadcast %cst_7 : f32 to vector<256x128xf32>
    %12 = arith.addf %10, %11 : vector<256x128xf32>
    %13 = arith.truncf %12 : vector<256x128xf32> to vector<256x128xbf16>
    %c0_8 = arith.constant 0 : index
    %c0_9 = arith.constant 0 : index
    %14 = vector.load %arg4[%c0_8, %c0_9] : memref<128x128xbf16, #tpu.memory_space<vmem>>, vector<128x128xbf16>
    %cst_10 = arith.constant dense<0.000000e+00> : vector<256x128xf32>
    %15 = tpu.matmul %13, %14, %cst_10 {dimension_numbers = #tpu.dot_dimension_numbers<[1], [0], [0], [1], [0, 0, 1, 1], [], []>} : vector<256x128xbf16>, vector<128x128xbf16>, vector<256x128xf32> -> vector<256x128xf32>
    %c0_11 = arith.constant 0 : index
    %c0_12 = arith.constant 0 : index
    %16 = vector.load %arg5[%c0_11, %c0_12] : memref<1x128xf32, #tpu.memory_space<vmem>>, vector<1x128xf32>
    %17 = vector.broadcast %16 : vector<1x128xf32> to vector<256x128xf32>
    %18 = arith.addf %15, %17 : vector<256x128xf32>
    %cst_13 = arith.constant 5.000000e-01 : f32
    %19 = vector.broadcast %cst_13 : f32 to vector<256x128xf32>
    %20 = arith.mulf %19, %18 : vector<256x128xf32>
    %21 = math.tanh %20 : vector<256x128xf32>
    %cst_14 = arith.constant 5.000000e-01 : f32
    %22 = vector.broadcast %cst_14 : f32 to vector<256x128xf32>
    %23 = arith.mulf %22, %21 : vector<256x128xf32>
    %cst_15 = arith.constant 5.000000e-01 : f32
    %24 = vector.broadcast %cst_15 : f32 to vector<256x128xf32>
    %25 = arith.addf %23, %24 : vector<256x128xf32>
    %26 = arith.truncf %25 : vector<256x128xf32> to vector<256x128xbf16>
    %c0_16 = arith.constant 0 : index
    %c0_17 = arith.constant 0 : index
    %27 = vector.load %arg6[%c0_16, %c0_17] : memref<128x128xbf16, #tpu.memory_space<vmem>>, vector<128x128xbf16>
    %cst_18 = arith.constant dense<0.000000e+00> : vector<256x128xf32>
    %28 = tpu.matmul %26, %27, %cst_18 {dimension_numbers = #tpu.dot_dimension_numbers<[1], [0], [0], [1], [0, 0, 1, 1], [], []>} : vector<256x128xbf16>, vector<128x128xbf16>, vector<256x128xf32> -> vector<256x128xf32>
    %c0_19 = arith.constant 0 : index
    %c0_20 = arith.constant 0 : index
    %29 = vector.load %arg7[%c0_19, %c0_20] : memref<1x128xf32, #tpu.memory_space<vmem>>, vector<1x128xf32>
    %30 = vector.broadcast %29 : vector<1x128xf32> to vector<256x128xf32>
    %31 = arith.addf %28, %30 : vector<256x128xf32>
    %cst_21 = arith.constant 5.000000e-01 : f32
    %32 = vector.broadcast %cst_21 : f32 to vector<256x128xf32>
    %33 = arith.mulf %32, %31 : vector<256x128xf32>
    %34 = math.tanh %33 : vector<256x128xf32>
    %cst_22 = arith.constant 5.000000e-01 : f32
    %35 = vector.broadcast %cst_22 : f32 to vector<256x128xf32>
    %36 = arith.mulf %35, %34 : vector<256x128xf32>
    %cst_23 = arith.constant 5.000000e-01 : f32
    %37 = vector.broadcast %cst_23 : f32 to vector<256x128xf32>
    %38 = arith.addf %36, %37 : vector<256x128xf32>
    %39 = arith.truncf %38 : vector<256x128xf32> to vector<256x128xbf16>
    %c0_24 = arith.constant 0 : index
    %c0_25 = arith.constant 0 : index
    %40 = vector.load %arg8[%c0_24, %c0_25] : memref<128x128xbf16, #tpu.memory_space<vmem>>, vector<128x128xbf16>
    %cst_26 = arith.constant dense<0.000000e+00> : vector<256x128xf32>
    %41 = tpu.matmul %39, %40, %cst_26 {dimension_numbers = #tpu.dot_dimension_numbers<[1], [0], [0], [1], [0, 0, 1, 1], [], []>} : vector<256x128xbf16>, vector<128x128xbf16>, vector<256x128xf32> -> vector<256x128xf32>
    %c0_27 = arith.constant 0 : index
    %c0_28 = arith.constant 0 : index
    %42 = vector.load %arg9[%c0_27, %c0_28] : memref<1x128xf32, #tpu.memory_space<vmem>>, vector<1x128xf32>
    %43 = vector.broadcast %42 : vector<1x128xf32> to vector<256x128xf32>
    %44 = arith.addf %41, %43 : vector<256x128xf32>
    %cst_29 = arith.constant 5.000000e-01 : f32
    %45 = vector.broadcast %cst_29 : f32 to vector<256x128xf32>
    %46 = arith.mulf %45, %44 : vector<256x128xf32>
    %47 = math.tanh %46 : vector<256x128xf32>
    %cst_30 = arith.constant 5.000000e-01 : f32
    %48 = vector.broadcast %cst_30 : f32 to vector<256x128xf32>
    %49 = arith.mulf %48, %47 : vector<256x128xf32>
    %cst_31 = arith.constant 5.000000e-01 : f32
    %50 = vector.broadcast %cst_31 : f32 to vector<256x128xf32>
    %51 = arith.addf %49, %50 : vector<256x128xf32>
    %52 = arith.truncf %51 : vector<256x128xf32> to vector<256x128xbf16>
    %c0_32 = arith.constant 0 : index
    %c0_33 = arith.constant 0 : index
    %53 = vector.load %arg10[%c0_32, %c0_33] : memref<128x128xbf16, #tpu.memory_space<vmem>>, vector<128x128xbf16>
    %cst_34 = arith.constant dense<0.000000e+00> : vector<256x128xf32>
    %54 = tpu.matmul %52, %53, %cst_34 {dimension_numbers = #tpu.dot_dimension_numbers<[1], [0], [0], [1], [0, 0, 1, 1], [], []>} : vector<256x128xbf16>, vector<128x128xbf16>, vector<256x128xf32> -> vector<256x128xf32>
    %c0_35 = arith.constant 0 : index
    %c0_36 = arith.constant 0 : index
    %55 = vector.load %arg11[%c0_35, %c0_36] : memref<1x128xf32, #tpu.memory_space<vmem>>, vector<1x128xf32>
    %56 = vector.broadcast %55 : vector<1x128xf32> to vector<256x128xf32>
    %57 = arith.addf %54, %56 : vector<256x128xf32>
    %c0_37 = arith.constant 0 : index
    %c0_38 = arith.constant 0 : index
    %58 = vector.load %arg12[%c0_37, %c0_38] : memref<256x128xf32, #tpu.memory_space<vmem>>, vector<256x128xf32>
    tpu.vector_store %arg12[%c0_37, %c0_38], %57 {strides = array<i32>} : memref<256x128xf32, #tpu.memory_space<vmem>>, vector<256x128xf32>,
    return
  }
  func.func @transform_0(%arg0: i32) -> (i32, i32) {
    %c0_i32 = arith.constant 0 : i32
    %c0_i32_0 = arith.constant 0 : i32
    return %arg0, %c0_i32 : i32, i32
  }
  func.func @transform_1(%arg0: i32) -> (i32, i32) {
    %c0_i32 = arith.constant 0 : i32
    %c0_i32_0 = arith.constant 0 : i32
    %c0_i32_1 = arith.constant 0 : i32
    return %c0_i32, %c0_i32_0 : i32, i32
  }
  func.func @transform_2(%arg0: i32) -> (i32, i32) {
    %c0_i32 = arith.constant 0 : i32
    %c0_i32_0 = arith.constant 0 : i32
    %c0_i32_1 = arith.constant 0 : i32
    return %c0_i32, %c0_i32_0 : i32, i32
  }
  func.func @transform_3(%arg0: i32) -> (i32, i32) {
    %c0_i32 = arith.constant 0 : i32
    %c0_i32_0 = arith.constant 0 : i32
    %c0_i32_1 = arith.constant 0 : i32
    return %c0_i32, %c0_i32_0 : i32, i32
  }
  func.func @transform_4(%arg0: i32) -> (i32, i32) {
    %c0_i32 = arith.constant 0 : i32
    %c0_i32_0 = arith.constant 0 : i32
    %c0_i32_1 = arith.constant 0 : i32
    return %c0_i32, %c0_i32_0 : i32, i32
  }
  func.func @transform_5(%arg0: i32) -> (i32, i32) {
    %c0_i32 = arith.constant 0 : i32
    %c0_i32_0 = arith.constant 0 : i32
    %c0_i32_1 = arith.constant 0 : i32
    return %c0_i32, %c0_i32_0 : i32, i32
  }
  func.func @transform_6(%arg0: i32) -> (i32, i32) {
    %c0_i32 = arith.constant 0 : i32
    %c0_i32_0 = arith.constant 0 : i32
    %c0_i32_1 = arith.constant 0 : i32
    return %c0_i32, %c0_i32_0 : i32, i32
  }
  func.func @transform_7(%arg0: i32) -> (i32, i32) {
    %c0_i32 = arith.constant 0 : i32
    %c0_i32_0 = arith.constant 0 : i32
    %c0_i32_1 = arith.constant 0 : i32
    return %c0_i32, %c0_i32_0 : i32, i32
  }
  func.func @transform_8(%arg0: i32) -> (i32, i32) {
    %c0_i32 = arith.constant 0 : i32
    %c0_i32_0 = arith.constant 0 : i32
    %c0_i32_1 = arith.constant 0 : i32
    return %c0_i32, %c0_i32_0 : i32, i32
  }
  func.func @transform_9(%arg0: i32) -> (i32, i32) {
    %c0_i32 = arith.constant 0 : i32
    %c0_i32_0 = arith.constant 0 : i32
    %c0_i32_1 = arith.constant 0 : i32
    return %c0_i32, %c0_i32_0 : i32, i32
  }
  func.func @transform_10(%arg0: i32) -> (i32, i32) {
    %c0_i32 = arith.constant 0 : i32
    %c0_i32_0 = arith.constant 0 : i32
    %c0_i32_1 = arith.constant 0 : i32
    return %c0_i32, %c0_i32_0 : i32, i32
  }
  func.func @transform_11(%arg0: i32) -> (i32, i32) {
    %c0_i32 = arith.constant 0 : i32
    %c0_i32_0 = arith.constant 0 : i32
    return %arg0, %c0_i32 : i32, i32
  }
}

</mosaic_0001>

<llo_original>
// kernel: dnn_forward.1
$region0: #{dnn_forward.1}
  #allocation0 [shape = 'u32[]', space=smem, size = 0x4, offset = 0x4, fixed_abs, tag = 'smem constant byte address 0x4 - core index']
  #allocation1 [shape = 'u32[72,128]{1,0:T(1,128)}', space=vmem, size = 0x9000, scoped, tag = 'internal scratch']
  %s0 = inlined_call_operand.vmem [shape: bf16[256,128], index: 0, kind: input, shape index: {}]
  %s1 = inlined_call_operand.vmem [shape: bf16[128,128], index: 1, kind: input, shape index: {}]
  %s2 = inlined_call_operand.vmem [shape: f32[1,128], index: 2, kind: input, shape index: {}]
  %s3 = inlined_call_operand.vmem [shape: bf16[128,128], index: 3, kind: input, shape index: {}]
  %s4 = inlined_call_operand.vmem [shape: f32[1,128], index: 4, kind: input, shape index: {}]
  %s5 = inlined_call_operand.hbm [shape: bf16[128,128], index: 5, kind: input, shape index: {}]
  %s6 = inlined_call_operand.vmem [shape: f32[1,128], index: 6, kind: input, shape index: {}]
  %s7 = inlined_call_operand.hbm [shape: bf16[128,128], index: 7, kind: input, shape index: {}]
  %s8 = inlined_call_operand.vmem [shape: f32[1,128], index: 8, kind: input, shape index: {}]
  %s9 = inlined_call_operand.hbm [shape: bf16[128,128], index: 9, kind: input, shape index: {}]
  %s10 = inlined_call_operand.vmem [shape: f32[1,128], index: 10, kind: input, shape index: {}]
  %s11 = inlined_call_operand.vmem [shape: f32[256,128], index: 11, kind: output, shape index: {}]
  %s12 = sld [smem:[#allocation0]]
  $region66: #{dnn_forward.1} parent=0
    _
  %s14 = ssub.s32 1, %s12
  %s15 = scalar_select 0, %s14, %s12
  $region1: #{dnn_forward.1} parent=0
    #allocation2 [shape = 'u8[32768]{0}', space=vmem, size = 0x8000, scoped, tag = 'input window, operand 5, single buffered']
    #allocation3 [shape = 's32[1]{0}', space=sflag, size = 0x4, scoped, tag = 'scoped memory for dnn_forward.1']
    #allocation4 [shape = 'u8[32768]{0}', space=vmem, size = 0x8000, scoped, tag = 'input window, operand 7, single buffered']
    #allocation5 [shape = 's32[1]{0}', space=sflag, size = 0x4, scoped, tag = 'scoped memory for dnn_forward.1']
    #allocation6 [shape = 'u8[32768]{0}', space=vmem, size = 0x8000, scoped, tag = 'input window, operand 9, single buffered']
    %16 = vsyncpa [#allocation3], 0
    %17 = vsyncpa [#allocation5], 0
    // Predicated region
    $region2: #{dnn_forward.1} parent=1 // pred_check
      _
    $region3: #{dnn_forward.1} parent=1 // pred_check_branch
      %19 = sbr.rel (0) target = $region5
    $region4: #{dnn_forward.1} parent=1 // pred_region
      _
    $region5: #{dnn_forward.1} parent=1 // pred_fallthru
      _
    // Predicated region
    $region6: #{dnn_forward.1} parent=1 // pred_check
      _
    $region7: #{dnn_forward.1} parent=1 // pred_check_branch
      %21 = sbr.rel (0) target = $region9
    $region8: #{dnn_forward.1} parent=1 // pred_region
      _
    $region9: #{dnn_forward.1} parent=1 // pred_fallthru
      _
    // Predicated region
    $region10: #{dnn_forward.1} parent=1 // pred_check
      _
    $region11: #{dnn_forward.1} parent=1 // pred_check_branch
      %23 = sbr.rel (0) target = $region13
    $region12: #{dnn_forward.1} parent=1 // pred_region
      _
    $region13: #{dnn_forward.1} parent=1 // pred_fallthru
      _
    // Predicated region
    $region14: #{dnn_forward.1} parent=1 // pred_check
      _
    $region15: #{dnn_forward.1} parent=1 // pred_check_branch
      %25 = sbr.rel (0) target = $region17
    $region16: #{dnn_forward.1} parent=1 // pred_region
      _
    $region17: #{dnn_forward.1} parent=1 // pred_fallthru
      _
    // Predicated region
    $region18: #{dnn_forward.1} parent=1 // pred_check
      _
    $region19: #{dnn_forward.1} parent=1 // pred_check_branch
      %27 = sbr.rel (0) target = $region21
    $region20: #{dnn_forward.1} parent=1 // pred_region
      _
    $region21: #{dnn_forward.1} parent=1 // pred_fallthru
      _
    // Predicated region
    $region22: #{dnn_forward.1} parent=1 // pred_check
      _
    $region23: #{dnn_forward.1} parent=1 // pred_check_branch
      %29 = sbr.rel (0) target = $region25
    $region24: #{dnn_forward.1} parent=1 // pred_region
      %31 = vsyncadd [#allocation3], 0
      %s32 = sshll.u32 %s5, 4
      %s33 = int_to_ptr.hbm [resolvable:$true] %s32
      %s34 = sshll.u32 [#allocation2], 4
      %s35 = int_to_ptr.vmem [resolvable:$true] %s34
      %40 = dma.hbm_to_vmem [thread:$0]  %s33, 1024, %s35, [#allocation3], 64, 64, 4
    $region25: #{dnn_forward.1} parent=1 // pred_fallthru
      _
    // Predicated region
    $region26: #{dnn_forward.1} parent=1 // pred_check
      _
    $region27: #{dnn_forward.1} parent=1 // pred_check_branch
      %42 = sbr.rel (0) target = $region29
    $region28: #{dnn_forward.1} parent=1 // pred_region
      _
    $region29: #{dnn_forward.1} parent=1 // pred_fallthru
      _
    // Predicated region
    $region30: #{dnn_forward.1} parent=1 // pred_check
      _
    $region31: #{dnn_forward.1} parent=1 // pred_check_branch
      %44 = sbr.rel (0) target = $region33
    $region32: #{dnn_forward.1} parent=1 // pred_region
      %46 = vsyncadd [#allocation5], 0
      %s47 = sshll.u32 %s7, 4
      %s48 = int_to_ptr.hbm [resolvable:$true] %s47
      %s49 = sshll.u32 [#allocation4], 4
      %s50 = int_to_ptr.vmem [resolvable:$true] %s49
      %55 = dma.hbm_to_vmem [thread:$0]  %s48, 1024, %s50, [#allocation5], 64, 64, 4
    $region33: #{dnn_forward.1} parent=1 // pred_fallthru
      _
    // Predicated region
    $region34: #{dnn_forward.1} parent=1 // pred_check
      _
    $region35: #{dnn_forward.1} parent=1 // pred_check_branch
      %57 = sbr.rel (0) target = $region37
    $region36: #{dnn_forward.1} parent=1 // pred_region
      _
    $region37: #{dnn_forward.1} parent=1 // pred_fallthru
      _
    // Predicated region
    $region38: #{dnn_forward.1} parent=1 // pred_check
      _
    $region39: #{dnn_forward.1} parent=1 // pred_check_branch
      %59 = sbr.rel (0) target = $region41
    $region40: #{dnn_forward.1} parent=1 // pred_region
      %61 = vsyncadd [#allocation5], 0
      %s62 = sshll.u32 %s9, 4
      %s63 = int_to_ptr.hbm [resolvable:$true] %s62
      %s64 = sshll.u32 [#allocation6], 4
      %s65 = int_to_ptr.vmem [resolvable:$true] %s64
      %70 = dma.hbm_to_vmem [thread:$0]  %s63, 1024, %s65, [#allocation5], 64, 64, 4
    $region41: #{dnn_forward.1} parent=1 // pred_fallthru
      _
    // Predicated region
    $region42: #{dnn_forward.1} parent=1 // pred_check
      _
    $region43: #{dnn_forward.1} parent=1 // pred_check_branch
      %72 = sbr.rel (0) target = $region45
    $region44: #{dnn_forward.1} parent=1 // pred_region
      _
    $region45: #{dnn_forward.1} parent=1 // pred_fallthru
      _
    // Predicated region
    $region46: #{dnn_forward.1} parent=1 // pred_check
      _
    $region47: #{dnn_forward.1} parent=1 // pred_check_branch
      %74 = sbr.rel (0) target = $region49
    $region48: #{dnn_forward.1} parent=1 // pred_region
      %76 = dma.done [#allocation3], 1024
    $region49: #{dnn_forward.1} parent=1 // pred_fallthru
      _
    // Predicated region
    $region50: #{dnn_forward.1} parent=1 // pred_check
      _
    $region51: #{dnn_forward.1} parent=1 // pred_check_branch
      %78 = sbr.rel (0) target = $region53
    $region52: #{dnn_forward.1} parent=1 // pred_region
      %80 = dma.done [#allocation5], 1024
    $region53: #{dnn_forward.1} parent=1 // pred_fallthru
      _
    // Predicated region
    $region54: #{dnn_forward.1} parent=1 // pred_check
      _
    $region55: #{dnn_forward.1} parent=1 // pred_check_branch
      %82 = sbr.rel (0) target = $region57
    $region56: #{dnn_forward.1} parent=1 // pred_region
      %84 = dma.done [#allocation5], 1024
    $region57: #{dnn_forward.1} parent=1 // pred_fallthru
      _
    %v85 = vld [vmem:[%s0] sm:$0xf]
    %v86 = vld [vmem:[%s0 + $0x4] sm:$0xf]
    %v87 = vld [vmem:[%s0 + $0x8] sm:$0xf]
    %v88 = vld [vmem:[%s0 + $0xc] sm:$0xf]
    %v89 = vld [vmem:[%s0 + $0x10] sm:$0xf]
    %v90 = vld [vmem:[%s0 + $0x14] sm:$0xf]
    %v91 = vld [vmem:[%s0 + $0x18] sm:$0xf]
    %v92 = vld [vmem:[%s0 + $0x1c] sm:$0xf]
    %v93 = vld [vmem:[%s0 + $0x20] sm:$0xf]
    %v94 = vld [vmem:[%s0 + $0x24] sm:$0xf]
    %v95 = vld [vmem:[%s0 + $0x28] sm:$0xf]
    %v96 = vld [vmem:[%s0 + $0x2c] sm:$0xf]
    %v97 = vld [vmem:[%s0 + $0x30] sm:$0xf]
    %v98 = vld [vmem:[%s0 + $0x34] sm:$0xf]
    %v99 = vld [vmem:[%s0 + $0x38] sm:$0xf]
    %v100 = vld [vmem:[%s0 + $0x3c] sm:$0xf]
    %v101 = vld [vmem:[%s0 + $0x40] sm:$0xf]
    %v102 = vld [vmem:[%s0 + $0x44] sm:$0xf]
    %v103 = vld [vmem:[%s0 + $0x48] sm:$0xf]
    %v104 = vld [vmem:[%s0 + $0x4c] sm:$0xf]
    %v105 = vld [vmem:[%s0 + $0x50] sm:$0xf]
    %v106 = vld [vmem:[%s0 + $0x54] sm:$0xf]
    %v107 = vld [vmem:[%s0 + $0x58] sm:$0xf]
    %v108 = vld [vmem:[%s0 + $0x5c] sm:$0xf]
    %v109 = vld [vmem:[%s0 + $0x60] sm:$0xf]
    %v110 = vld [vmem:[%s0 + $0x64] sm:$0xf]
    %v111 = vld [vmem:[%s0 + $0x68] sm:$0xf]
    %v112 = vld [vmem:[%s0 + $0x6c] sm:$0xf]
    %v113 = vld [vmem:[%s0 + $0x70] sm:$0xf]
    %v114 = vld [vmem:[%s0 + $0x74] sm:$0xf]
    %v115 = vld [vmem:[%s0 + $0x78] sm:$0xf]
    %v116 = vld [vmem:[%s0 + $0x7c] sm:$0xf]
    %v117 = vld [vmem:[%s1] sm:$0xf]
    %v118 = vld [vmem:[%s1 + $0x4] sm:$0xf]
    %v119 = vld [vmem:[%s1 + $0x8] sm:$0xf]
    %v120 = vld [vmem:[%s1 + $0xc] sm:$0xf]
    %v121 = vld [vmem:[%s1 + $0x10] sm:$0xf]
    %v122 = vld [vmem:[%s1 + $0x14] sm:$0xf]
    %v123 = vld [vmem:[%s1 + $0x18] sm:$0xf]
    %v124 = vld [vmem:[%s1 + $0x1c] sm:$0xf]
    %v125 = vld [vmem:[%s1 + $0x20] sm:$0xf]
    %v126 = vld [vmem:[%s1 + $0x24] sm:$0xf]
    %v127 = vld [vmem:[%s1 + $0x28] sm:$0xf]
    %v128 = vld [vmem:[%s1 + $0x2c] sm:$0xf]
    %v129 = vld [vmem:[%s1 + $0x30] sm:$0xf]
    %v130 = vld [vmem:[%s1 + $0x34] sm:$0xf]
    %v131 = vld [vmem:[%s1 + $0x38] sm:$0xf]
    %v132 = vld [vmem:[%s1 + $0x3c] sm:$0xf]
    %v133 = vld [vmem:[%s2] sm:$0x1]
    %v135 = vperm.slane %v133, 0
    %v169 = vunpack.c.l.b16 %v85
    %v170 = vunpack.c.l.b16 %v86
    %v171 = vunpack.c.l.b16 %v87
    %v172 = vunpack.c.l.b16 %v88
    %v173 = vunpack.c.l.b16 %v89
    %v174 = vunpack.c.l.b16 %v90
    %v175 = vunpack.c.l.b16 %v91
    %v176 = vunpack.c.l.b16 %v92
    %v177 = vunpack.c.l.b16 %v93
    %v178 = vunpack.c.l.b16 %v94
    %v179 = vunpack.c.l.b16 %v95
    %v180 = vunpack.c.l.b16 %v96
    %v181 = vunpack.c.l.b16 %v97
    %v182 = vunpack.c.l.b16 %v98
    %v183 = vunpack.c.l.b16 %v99
    %v184 = vunpack.c.l.b16 %v100
    %v185 = vunpack.c.l.b16 %v101
    %v186 = vunpack.c.l.b16 %v102
    %v187 = vunpack.c.l.b16 %v103
    %v188 = vunpack.c.l.b16 %v104
    %v189 = vunpack.c.l.b16 %v105
    %v190 = vunpack.c.l.b16 %v106
    %v191 = vunpack.c.l.b16 %v107
    %v192 = vunpack.c.l.b16 %v108
    %v193 = vunpack.c.l.b16 %v109
    %v194 = vunpack.c.l.b16 %v110
    %v195 = vunpack.c.l.b16 %v111
    %v196 = vunpack.c.l.b16 %v112
    %v197 = vunpack.c.l.b16 %v113
    %v198 = vunpack.c.l.b16 %v114
    %v199 = vunpack.c.l.b16 %v115
    %v200 = vunpack.c.l.b16 %v116
    %v201 = vpack.c.b16 %v170, %v169
    %v202 = vpack.c.b16 %v172, %v171
    %v203 = vpack.c.b16 %v174, %v173
    %v204 = vpack.c.b16 %v176, %v175
    %v205 = vpack.c.b16 %v178, %v177
    %v206 = vpack.c.b16 %v180, %v179
    %v207 = vpack.c.b16 %v182, %v181
    %v208 = vpack.c.b16 %v184, %v183
    %v209 = vpack.c.b16 %v186, %v185
    %v210 = vpack.c.b16 %v188, %v187
    %v211 = vpack.c.b16 %v190, %v189
    %v212 = vpack.c.b16 %v192, %v191
    %v213 = vpack.c.b16 %v194, %v193
    %v214 = vpack.c.b16 %v196, %v195
    %v215 = vpack.c.b16 %v198, %v197
    %v216 = vpack.c.b16 %v200, %v199
    %v249 = vunpack.c.l.b16 %v117
    %v250 = vunpack.c.l.b16 %v118
    %v251 = vunpack.c.l.b16 %v119
    %v252 = vunpack.c.l.b16 %v120
    %v253 = vunpack.c.l.b16 %v121
    %v254 = vunpack.c.l.b16 %v122
    %v255 = vunpack.c.l.b16 %v123
    %v256 = vunpack.c.l.b16 %v124
    %v257 = vunpack.c.l.b16 %v125
    %v258 = vunpack.c.l.b16 %v126
    %v259 = vunpack.c.l.b16 %v127
    %v260 = vunpack.c.l.b16 %v128
    %v261 = vunpack.c.l.b16 %v129
    %v262 = vunpack.c.l.b16 %v130
    %v263 = vunpack.c.l.b16 %v131
    %v264 = vunpack.c.l.b16 %v132
    %v265 = vpack.c.b16 %v250, %v249
    %v266 = vpack.c.b16 %v252, %v251
    %v267 = vpack.c.b16 %v254, %v253
    %v268 = vpack.c.b16 %v256, %v255
    %v269 = vpack.c.b16 %v258, %v257
    %v270 = vpack.c.b16 %v260, %v259
    %v271 = vpack.c.b16 %v262, %v261
    %v272 = vpack.c.b16 %v264, %v263
    %281 = vmatpush.bf16.msra.mxu0 %v272
    %282 = vmatpush.bf16.msra.mxu0 %v271
    %283 = vmatpush.bf16.msra.mxu0 %v270
    %284 = vmatpush.bf16.msra.mxu0 %v269
    %285 = vmatpush.bf16.msra.mxu0 %v268
    %286 = vmatpush.bf16.msra.mxu0 %v267
    %287 = vmatpush.bf16.msra.mxu0 %v266
    %288 = vmatpush.bf16.msra.mxu0 %v265
    %289 = vmatmul.bf16.gmra.mxu0 %v201
    %v290 = vpop.f32.mrf.mxu0
    %v291 = vadd.f32 %v135, %v290
    %v292 = vpop.f32.mrf.mxu0
    %v293 = vadd.f32 %v135, %v292
    %294 = vmatmul.bf16.gmra.mxu0 %v202
    %v295 = vpop.f32.mrf.mxu0
    %v296 = vadd.f32 %v135, %v295
    %v297 = vpop.f32.mrf.mxu0
    %v298 = vadd.f32 %v135, %v297
    %299 = vmatmul.bf16.gmra.mxu0 %v203
    %v300 = vpop.f32.mrf.mxu0
    %v301 = vadd.f32 %v135, %v300
    %v302 = vpop.f32.mrf.mxu0
    %v303 = vadd.f32 %v135, %v302
    %304 = vmatmul.bf16.gmra.mxu0 %v204
    %v305 = vpop.f32.mrf.mxu0
    %v306 = vadd.f32 %v135, %v305
    %v307 = vpop.f32.mrf.mxu0
    %v308 = vadd.f32 %v135, %v307
    %309 = vmatmul.bf16.gmra.mxu0 %v205
    %v310 = vpop.f32.mrf.mxu0
    %v311 = vadd.f32 %v135, %v310
    %v312 = vpop.f32.mrf.mxu0
    %v313 = vadd.f32 %v135, %v312
    %314 = vmatmul.bf16.gmra.mxu0 %v206
    %v315 = vpop.f32.mrf.mxu0
    %v316 = vadd.f32 %v135, %v315
    %v317 = vpop.f32.mrf.mxu0
    %v318 = vadd.f32 %v135, %v317
    %319 = vmatmul.bf16.gmra.mxu0 %v207
    %v320 = vpop.f32.mrf.mxu0
    %v321 = vadd.f32 %v135, %v320
    %v322 = vpop.f32.mrf.mxu0
    %v323 = vadd.f32 %v135, %v322
    %324 = vmatmul.bf16.gmra.mxu0 %v208
    %v325 = vpop.f32.mrf.mxu0
    %v326 = vadd.f32 %v135, %v325
    %v327 = vpop.f32.mrf.mxu0
    %v328 = vadd.f32 %v135, %v327
    %329 = vmatmul.bf16.gmra.mxu0 %v209
    %v330 = vpop.f32.mrf.mxu0
    %v331 = vadd.f32 %v135, %v330
    %v332 = vpop.f32.mrf.mxu0
    %v333 = vadd.f32 %v135, %v332
    %334 = vmatmul.bf16.gmra.mxu0 %v210
    %v335 = vpop.f32.mrf.mxu0
    %v336 = vadd.f32 %v135, %v335
    %v337 = vpop.f32.mrf.mxu0
    %v338 = vadd.f32 %v135, %v337
    %339 = vmatmul.bf16.gmra.mxu0 %v211
    %v340 = vpop.f32.mrf.mxu0
    %v341 = vadd.f32 %v135, %v340
    %v342 = vpop.f32.mrf.mxu0
    %v343 = vadd.f32 %v135, %v342
    %344 = vmatmul.bf16.gmra.mxu0 %v212
    %v345 = vpop.f32.mrf.mxu0
    %v346 = vadd.f32 %v135, %v345
    %v347 = vpop.f32.mrf.mxu0
    %v348 = vadd.f32 %v135, %v347
    %349 = vmatmul.bf16.gmra.mxu0 %v213
    %v350 = vpop.f32.mrf.mxu0
    %v351 = vadd.f32 %v135, %v350
    %v352 = vpop.f32.mrf.mxu0
    %v353 = vadd.f32 %v135, %v352
    %354 = vmatmul.bf16.gmra.mxu0 %v214
    %v355 = vpop.f32.mrf.mxu0
    %v356 = vadd.f32 %v135, %v355
    %v357 = vpop.f32.mrf.mxu0
    %v358 = vadd.f32 %v135, %v357
    %359 = vmatmul.bf16.gmra.mxu0 %v215
    %v360 = vpop.f32.mrf.mxu0
    %v361 = vadd.f32 %v135, %v360
    %v362 = vpop.f32.mrf.mxu0
    %v363 = vadd.f32 %v135, %v362
    %364 = vmatmul.bf16.gmra.mxu0 %v216
    %v365 = vpop.f32.mrf.mxu0
    %v366 = vadd.f32 %v135, %v365
    %v367 = vpop.f32.mrf.mxu0
    %v368 = vadd.f32 %v135, %v367
    %369 = vdwg.mxu0
    %v370 = vmul.f32 %v291, 0.5
    %v371 = vmul.f32 %v293, 0.5
    %v372 = vmul.f32 %v296, 0.5
    %v373 = vmul.f32 %v298, 0.5
    %v374 = vmul.f32 %v301, 0.5
    %v375 = vmul.f32 %v303, 0.5
    %v376 = vmul.f32 %v306, 0.5
    %v377 = vmul.f32 %v308, 0.5
    %v378 = vmul.f32 %v311, 0.5
    %v379 = vmul.f32 %v313, 0.5
    %v380 = vmul.f32 %v316, 0.5
    %v381 = vmul.f32 %v318, 0.5
    %v382 = vmul.f32 %v321, 0.5
    %v383 = vmul.f32 %v323, 0.5
    %v384 = vmul.f32 %v326, 0.5
    %v385 = vmul.f32 %v328, 0.5
    %v386 = vmul.f32 %v331, 0.5
    %v387 = vmul.f32 %v333, 0.5
    %v388 = vmul.f32 %v336, 0.5
    %v389 = vmul.f32 %v338, 0.5
    %v390 = vmul.f32 %v341, 0.5
    %v391 = vmul.f32 %v343, 0.5
    %v392 = vmul.f32 %v346, 0.5
    %v393 = vmul.f32 %v348, 0.5
    %v394 = vmul.f32 %v351, 0.5
    %v395 = vmul.f32 %v353, 0.5
    %v396 = vmul.f32 %v356, 0.5
    %v397 = vmul.f32 %v358, 0.5
    %v398 = vmul.f32 %v361, 0.5
    %v399 = vmul.f32 %v363, 0.5
    %v400 = vmul.f32 %v366, 0.5
    %v401 = vmul.f32 %v368, 0.5
    %v402 = vtanh.pop %v370
    %v403 = vtanh.pop %v371
    %v404 = vtanh.pop %v372
    %v405 = vtanh.pop %v373
    %v406 = vtanh.pop %v374
    %v407 = vtanh.pop %v375
    %v408 = vtanh.pop %v376
    %v409 = vtanh.pop %v377
    %v410 = vtanh.pop %v378
    %v411 = vtanh.pop %v379
    %v412 = vtanh.pop %v380
    %v413 = vtanh.pop %v381
    %v414 = vtanh.pop %v382
    %v415 = vtanh.pop %v383
    %v416 = vtanh.pop %v384
    %v417 = vtanh.pop %v385
    %v418 = vtanh.pop %v386
    %v419 = vtanh.pop %v387
    %v420 = vtanh.pop %v388
    %v421 = vtanh.pop %v389
    %v422 = vtanh.pop %v390
    %v423 = vtanh.pop %v391
    %v424 = vtanh.pop %v392
    %v425 = vtanh.pop %v393
    %v426 = vtanh.pop %v394
    %v427 = vtanh.pop %v395
    %v428 = vtanh.pop %v396
    %v429 = vtanh.pop %v397
    %v430 = vtanh.pop %v398
    %v431 = vtanh.pop %v399
    %v432 = vtanh.pop %v400
    %v433 = vtanh.pop %v401
    %v434 = vmul.f32 %v402, 0.5
    %v435 = vmul.f32 %v403, 0.5
    %v436 = vmul.f32 %v404, 0.5
    %v437 = vmul.f32 %v405, 0.5
    %v438 = vmul.f32 %v406, 0.5
    %v439 = vmul.f32 %v407, 0.5
    %v440 = vmul.f32 %v408, 0.5
    %v441 = vmul.f32 %v409, 0.5
    %v442 = vmul.f32 %v410, 0.5
    %v443 = vmul.f32 %v411, 0.5
    %v444 = vmul.f32 %v412, 0.5
    %v445 = vmul.f32 %v413, 0.5
    %v446 = vmul.f32 %v414, 0.5
    %v447 = vmul.f32 %v415, 0.5
    %v448 = vmul.f32 %v416, 0.5
    %v449 = vmul.f32 %v417, 0.5
    %v450 = vmul.f32 %v418, 0.5
    %v451 = vmul.f32 %v419, 0.5
    %v452 = vmul.f32 %v420, 0.5
    %v453 = vmul.f32 %v421, 0.5
    %v454 = vmul.f32 %v422, 0.5
    %v455 = vmul.f32 %v423, 0.5
    %v456 = vmul.f32 %v424, 0.5
    %v457 = vmul.f32 %v425, 0.5
    %v458 = vmul.f32 %v426, 0.5
    %v459 = vmul.f32 %v427, 0.5
    %v460 = vmul.f32 %v428, 0.5
    %v461 = vmul.f32 %v429, 0.5
    %v462 = vmul.f32 %v430, 0.5
    %v463 = vmul.f32 %v431, 0.5
    %v464 = vmul.f32 %v432, 0.5
    %v465 = vmul.f32 %v433, 0.5
    %v466 = vadd.f32 %v434, 0.5
    %v467 = vadd.f32 %v435, 0.5
    %v468 = vadd.f32 %v436, 0.5
    %v469 = vadd.f32 %v437, 0.5
    %v470 = vadd.f32 %v438, 0.5
    %v471 = vadd.f32 %v439, 0.5
    %v472 = vadd.f32 %v440, 0.5
    %v473 = vadd.f32 %v441, 0.5
    %v474 = vadd.f32 %v442, 0.5
    %v475 = vadd.f32 %v443, 0.5
    %v476 = vadd.f32 %v444, 0.5
    %v477 = vadd.f32 %v445, 0.5
    %v478 = vadd.f32 %v446, 0.5
    %v479 = vadd.f32 %v447, 0.5
    %v480 = vadd.f32 %v448, 0.5
    %v481 = vadd.f32 %v449, 0.5
    %v482 = vadd.f32 %v450, 0.5
    %v483 = vadd.f32 %v451, 0.5
    %v484 = vadd.f32 %v452, 0.5
    %v485 = vadd.f32 %v453, 0.5
    %v486 = vadd.f32 %v454, 0.5
    %v487 = vadd.f32 %v455, 0.5
    %v488 = vadd.f32 %v456, 0.5
    %v489 = vadd.f32 %v457, 0.5
    %v490 = vadd.f32 %v458, 0.5
    %v491 = vadd.f32 %v459, 0.5
    %v492 = vadd.f32 %v460, 0.5
    %v493 = vadd.f32 %v461, 0.5
    %v494 = vadd.f32 %v462, 0.5
    %v495 = vadd.f32 %v463, 0.5
    %v496 = vadd.f32 %v464, 0.5
    %v497 = vadd.f32 %v465, 0.5
    %v498 = vpack.c.bf16 %v467, %v466
    %v499 = vpack.c.bf16 %v469, %v468
    %v500 = vpack.c.bf16 %v471, %v470
    %v501 = vpack.c.bf16 %v473, %v472
    %v502 = vpack.c.bf16 %v475, %v474
    %v503 = vpack.c.bf16 %v477, %v476
    %v504 = vpack.c.bf16 %v479, %v478
    %v505 = vpack.c.bf16 %v481, %v480
    %v506 = vpack.c.bf16 %v483, %v482
    %v507 = vpack.c.bf16 %v485, %v484
    %v508 = vpack.c.bf16 %v487, %v486
    %v509 = vpack.c.bf16 %v489, %v488
    %v510 = vpack.c.bf16 %v491, %v490
    %v511 = vpack.c.bf16 %v493, %v492
    %v512 = vpack.c.bf16 %v495, %v494
    %v513 = vpack.c.bf16 %v497, %v496
    %v514 = vld [vmem:[%s3] sm:$0xf]
    %v515 = vld [vmem:[%s3 + $0x4] sm:$0xf]
    %v516 = vld [vmem:[%s3 + $0x8] sm:$0xf]
    %v517 = vld [vmem:[%s3 + $0xc] sm:$0xf]
    %v518 = vld [vmem:[%s3 + $0x10] sm:$0xf]
    %v519 = vld [vmem:[%s3 + $0x14] sm:$0xf]
    %v520 = vld [vmem:[%s3 + $0x18] sm:$0xf]
    %v521 = vld [vmem:[%s3 + $0x1c] sm:$0xf]
    %v522 = vld [vmem:[%s3 + $0x20] sm:$0xf]
    %v523 = vld [vmem:[%s3 + $0x24] sm:$0xf]
    %v524 = vld [vmem:[%s3 + $0x28] sm:$0xf]
    %v525 = vld [vmem:[%s3 + $0x2c] sm:$0xf]
    %v526 = vld [vmem:[%s3 + $0x30] sm:$0xf]
    %v527 = vld [vmem:[%s3 + $0x34] sm:$0xf]
    %v528 = vld [vmem:[%s3 + $0x38] sm:$0xf]
    %v529 = vld [vmem:[%s3 + $0x3c] sm:$0xf]
    %v530 = vld [vmem:[%s4] sm:$0x1]
    %v532 = vperm.slane %v530, 0
    %v550 = vunpack.c.l.b16 %v514
    %v551 = vunpack.c.l.b16 %v515
    %v552 = vunpack.c.l.b16 %v516
    %v553 = vunpack.c.l.b16 %v517
    %v554 = vunpack.c.l.b16 %v518
    %v555 = vunpack.c.l.b16 %v519
    %v556 = vunpack.c.l.b16 %v520
    %v557 = vunpack.c.l.b16 %v521
    %v558 = vunpack.c.l.b16 %v522
    %v559 = vunpack.c.l.b16 %v523
    %v560 = vunpack.c.l.b16 %v524
    %v561 = vunpack.c.l.b16 %v525
    %v562 = vunpack.c.l.b16 %v526
    %v563 = vunpack.c.l.b16 %v527
    %v564 = vunpack.c.l.b16 %v528
    %v565 = vunpack.c.l.b16 %v529
    %v566 = vpack.c.b16 %v551, %v550
    %v567 = vpack.c.b16 %v553, %v552
    %v568 = vpack.c.b16 %v555, %v554
    %v569 = vpack.c.b16 %v557, %v556
    %v570 = vpack.c.b16 %v559, %v558
    %v571 = vpack.c.b16 %v561, %v560
    %v572 = vpack.c.b16 %v563, %v562
    %v573 = vpack.c.b16 %v565, %v564
    %582 = vmatpush.bf16.msra.mxu0 %v573
    %583 = vmatpush.bf16.msra.mxu0 %v572
    %584 = vmatpush.bf16.msra.mxu0 %v571
    %585 = vmatpush.bf16.msra.mxu0 %v570
    %586 = vmatpush.bf16.msra.mxu0 %v569
    %587 = vmatpush.bf16.msra.mxu0 %v568
    %588 = vmatpush.bf16.msra.mxu0 %v567
    %589 = vmatpush.bf16.msra.mxu0 %v566
    %590 = vmatmul.bf16.gmra.mxu0 %v498
    %v591 = vpop.f32.mrf.mxu0
    %v592 = vadd.f32 %v532, %v591
    %v593 = vpop.f32.mrf.mxu0
    %v594 = vadd.f32 %v532, %v593
    %595 = vmatmul.bf16.gmra.mxu0 %v499
    %v596 = vpop.f32.mrf.mxu0
    %v597 = vadd.f32 %v532, %v596
    %v598 = vpop.f32.mrf.mxu0
    %v599 = vadd.f32 %v532, %v598
    %600 = vmatmul.bf16.gmra.mxu0 %v500
    %v601 = vpop.f32.mrf.mxu0
    %v602 = vadd.f32 %v532, %v601
    %v603 = vpop.f32.mrf.mxu0
    %v604 = vadd.f32 %v532, %v603
    %605 = vmatmul.bf16.gmra.mxu0 %v501
    %v606 = vpop.f32.mrf.mxu0
    %v607 = vadd.f32 %v532, %v606
    %v608 = vpop.f32.mrf.mxu0
    %v609 = vadd.f32 %v532, %v608
    %610 = vmatmul.bf16.gmra.mxu0 %v502
    %v611 = vpop.f32.mrf.mxu0
    %v612 = vadd.f32 %v532, %v611
    %v613 = vpop.f32.mrf.mxu0
    %v614 = vadd.f32 %v532, %v613
    %615 = vmatmul.bf16.gmra.mxu0 %v503
    %v616 = vpop.f32.mrf.mxu0
    %v617 = vadd.f32 %v532, %v616
    %v618 = vpop.f32.mrf.mxu0
    %v619 = vadd.f32 %v532, %v618
    %620 = vmatmul.bf16.gmra.mxu0 %v504
    %v621 = vpop.f32.mrf.mxu0
    %v622 = vadd.f32 %v532, %v621
    %v623 = vpop.f32.mrf.mxu0
    %v624 = vadd.f32 %v532, %v623
    %625 = vmatmul.bf16.gmra.mxu0 %v505
    %v626 = vpop.f32.mrf.mxu0
    %v627 = vadd.f32 %v532, %v626
    %v628 = vpop.f32.mrf.mxu0
    %v629 = vadd.f32 %v532, %v628
    %630 = vmatmul.bf16.gmra.mxu0 %v506
    %v631 = vpop.f32.mrf.mxu0
    %v632 = vadd.f32 %v532, %v631
    %v633 = vpop.f32.mrf.mxu0
    %v634 = vadd.f32 %v532, %v633
    %635 = vmatmul.bf16.gmra.mxu0 %v507
    %v636 = vpop.f32.mrf.mxu0
    %v637 = vadd.f32 %v532, %v636
    %v638 = vpop.f32.mrf.mxu0
    %v639 = vadd.f32 %v532, %v638
    %640 = vmatmul.bf16.gmra.mxu0 %v508
    %v641 = vpop.f32.mrf.mxu0
    %v642 = vadd.f32 %v532, %v641
    %v643 = vpop.f32.mrf.mxu0
    %v644 = vadd.f32 %v532, %v643
    %645 = vmatmul.bf16.gmra.mxu0 %v509
    %v646 = vpop.f32.mrf.mxu0
    %v647 = vadd.f32 %v532, %v646
    %v648 = vpop.f32.mrf.mxu0
    %v649 = vadd.f32 %v532, %v648
    %650 = vmatmul.bf16.gmra.mxu0 %v510
    %v651 = vpop.f32.mrf.mxu0
    %v652 = vadd.f32 %v532, %v651
    %v653 = vpop.f32.mrf.mxu0
    %v654 = vadd.f32 %v532, %v653
    %655 = vmatmul.bf16.gmra.mxu0 %v511
    %v656 = vpop.f32.mrf.mxu0
    %v657 = vadd.f32 %v532, %v656
    %v658 = vpop.f32.mrf.mxu0
    %v659 = vadd.f32 %v532, %v658
    %660 = vmatmul.bf16.gmra.mxu0 %v512
    %v661 = vpop.f32.mrf.mxu0
    %v662 = vadd.f32 %v532, %v661
    %v663 = vpop.f32.mrf.mxu0
    %v664 = vadd.f32 %v532, %v663
    %665 = vmatmul.bf16.gmra.mxu0 %v513
    %v666 = vpop.f32.mrf.mxu0
    %v667 = vadd.f32 %v532, %v666
    %v668 = vpop.f32.mrf.mxu0
    %v669 = vadd.f32 %v532, %v668
    %670 = vdwg.mxu0
    %v671 = vmul.f32 %v592, 0.5
    %v672 = vmul.f32 %v594, 0.5
    %v673 = vmul.f32 %v597, 0.5
    %v674 = vmul.f32 %v599, 0.5
    %v675 = vmul.f32 %v602, 0.5
    %v676 = vmul.f32 %v604, 0.5
    %v677 = vmul.f32 %v607, 0.5
    %v678 = vmul.f32 %v609, 0.5
    %v679 = vmul.f32 %v612, 0.5
    %v680 = vmul.f32 %v614, 0.5
    %v681 = vmul.f32 %v617, 0.5
    %v682 = vmul.f32 %v619, 0.5
    %v683 = vmul.f32 %v622, 0.5
    %v684 = vmul.f32 %v624, 0.5
    %v685 = vmul.f32 %v627, 0.5
    %v686 = vmul.f32 %v629, 0.5
    %v687 = vmul.f32 %v632, 0.5
    %v688 = vmul.f32 %v634, 0.5
    %v689 = vmul.f32 %v637, 0.5
    %v690 = vmul.f32 %v639, 0.5
    %v691 = vmul.f32 %v642, 0.5
    %v692 = vmul.f32 %v644, 0.5
    %v693 = vmul.f32 %v647, 0.5
    %v694 = vmul.f32 %v649, 0.5
    %v695 = vmul.f32 %v652, 0.5
    %v696 = vmul.f32 %v654, 0.5
    %v697 = vmul.f32 %v657, 0.5
    %v698 = vmul.f32 %v659, 0.5
    %v699 = vmul.f32 %v662, 0.5
    %v700 = vmul.f32 %v664, 0.5
    %v701 = vmul.f32 %v667, 0.5
    %v702 = vmul.f32 %v669, 0.5
    %v703 = vtanh.pop %v671
    %v704 = vtanh.pop %v672
    %v705 = vtanh.pop %v673
    %v706 = vtanh.pop %v674
    %v707 = vtanh.pop %v675
    %v708 = vtanh.pop %v676
    %v709 = vtanh.pop %v677
    %v710 = vtanh.pop %v678
    %v711 = vtanh.pop %v679
    %v712 = vtanh.pop %v680
    %v713 = vtanh.pop %v681
    %v714 = vtanh.pop %v682
    %v715 = vtanh.pop %v683
    %v716 = vtanh.pop %v684
    %v717 = vtanh.pop %v685
    %v718 = vtanh.pop %v686
    %v719 = vtanh.pop %v687
    %v720 = vtanh.pop %v688
    %v721 = vtanh.pop %v689
    %v722 = vtanh.pop %v690
    %v723 = vtanh.pop %v691
    %v724 = vtanh.pop %v692
    %v725 = vtanh.pop %v693
    %v726 = vtanh.pop %v694
    %v727 = vtanh.pop %v695
    %v728 = vtanh.pop %v696
    %v729 = vtanh.pop %v697
    %v730 = vtanh.pop %v698
    %v731 = vtanh.pop %v699
    %v732 = vtanh.pop %v700
    %v733 = vtanh.pop %v701
    %v734 = vtanh.pop %v702
    %v735 = vmul.f32 %v703, 0.5
    %v736 = vmul.f32 %v704, 0.5
    %v737 = vmul.f32 %v705, 0.5
    %v738 = vmul.f32 %v706, 0.5
    %v739 = vmul.f32 %v707, 0.5
    %v740 = vmul.f32 %v708, 0.5
    %v741 = vmul.f32 %v709, 0.5
    %v742 = vmul.f32 %v710, 0.5
    %v743 = vmul.f32 %v711, 0.5
    %v744 = vmul.f32 %v712, 0.5
    %v745 = vmul.f32 %v713, 0.5
    %v746 = vmul.f32 %v714, 0.5
    %v747 = vmul.f32 %v715, 0.5
    %v748 = vmul.f32 %v716, 0.5
    %v749 = vmul.f32 %v717, 0.5
    %v750 = vmul.f32 %v718, 0.5
    %v751 = vmul.f32 %v719, 0.5
    %v752 = vmul.f32 %v720, 0.5
    %v753 = vmul.f32 %v721, 0.5
    %v754 = vmul.f32 %v722, 0.5
    %v755 = vmul.f32 %v723, 0.5
    %v756 = vmul.f32 %v724, 0.5
    %v757 = vmul.f32 %v725, 0.5
    %v758 = vmul.f32 %v726, 0.5
    %v759 = vmul.f32 %v727, 0.5
    %v760 = vmul.f32 %v728, 0.5
    %v761 = vmul.f32 %v729, 0.5
    %v762 = vmul.f32 %v730, 0.5
    %v763 = vmul.f32 %v731, 0.5
    %v764 = vmul.f32 %v732, 0.5
    %v765 = vmul.f32 %v733, 0.5
    %v766 = vmul.f32 %v734, 0.5
    %v767 = vadd.f32 %v735, 0.5
    %v768 = vadd.f32 %v736, 0.5
    %v769 = vadd.f32 %v737, 0.5
    %v770 = vadd.f32 %v738, 0.5
    %v771 = vadd.f32 %v739, 0.5
    %v772 = vadd.f32 %v740, 0.5
    %v773 = vadd.f32 %v741, 0.5
    %v774 = vadd.f32 %v742, 0.5
    %v775 = vadd.f32 %v743, 0.5
    %v776 = vadd.f32 %v744, 0.5
    %v777 = vadd.f32 %v745, 0.5
    %v778 = vadd.f32 %v746, 0.5
    %v779 = vadd.f32 %v747, 0.5
    %v780 = vadd.f32 %v748, 0.5
    %v781 = vadd.f32 %v749, 0.5
    %v782 = vadd.f32 %v750, 0.5
    %v783 = vadd.f32 %v751, 0.5
    %v784 = vadd.f32 %v752, 0.5
    %v785 = vadd.f32 %v753, 0.5
    %v786 = vadd.f32 %v754, 0.5
    %v787 = vadd.f32 %v755, 0.5
    %v788 = vadd.f32 %v756, 0.5
    %v789 = vadd.f32 %v757, 0.5
    %v790 = vadd.f32 %v758, 0.5
    %v791 = vadd.f32 %v759, 0.5
    %v792 = vadd.f32 %v760, 0.5
    %v793 = vadd.f32 %v761, 0.5
    %v794 = vadd.f32 %v762, 0.5
    %v795 = vadd.f32 %v763, 0.5
    %v796 = vadd.f32 %v764, 0.5
    %v797 = vadd.f32 %v765, 0.5
    %v798 = vadd.f32 %v766, 0.5
    %v799 = vpack.c.bf16 %v768, %v767
    %v800 = vpack.c.bf16 %v770, %v769
    %v801 = vpack.c.bf16 %v772, %v771
    %v802 = vpack.c.bf16 %v774, %v773
    %v803 = vpack.c.bf16 %v776, %v775
    %v804 = vpack.c.bf16 %v778, %v777
    %v805 = vpack.c.bf16 %v780, %v779
    %v806 = vpack.c.bf16 %v782, %v781
    %v807 = vpack.c.bf16 %v784, %v783
    %v808 = vpack.c.bf16 %v786, %v785
    %v809 = vpack.c.bf16 %v788, %v787
    %v810 = vpack.c.bf16 %v790, %v789
    %v811 = vpack.c.bf16 %v792, %v791
    %v812 = vpack.c.bf16 %v794, %v793
    %v813 = vpack.c.bf16 %v796, %v795
    %v814 = vpack.c.bf16 %v798, %v797
    %v815 = vld [vmem:[#allocation2] sm:$0xf]
    %v816 = vld [vmem:[#allocation2 + $0x4] sm:$0xf]
    %v817 = vld [vmem:[#allocation2 + $0x8] sm:$0xf]
    %v818 = vld [vmem:[#allocation2 + $0xc] sm:$0xf]
    %v819 = vld [vmem:[#allocation2 + $0x10] sm:$0xf]
    %v820 = vld [vmem:[#allocation2 + $0x14] sm:$0xf]
    %v821 = vld [vmem:[#allocation2 + $0x18] sm:$0xf]
    %v822 = vld [vmem:[#allocation2 + $0x1c] sm:$0xf]
    %v823 = vld [vmem:[#allocation2 + $0x20] sm:$0xf]
    %v824 = vld [vmem:[#allocation2 + $0x24] sm:$0xf]
    %v825 = vld [vmem:[#allocation2 + $0x28] sm:$0xf]
    %v826 = vld [vmem:[#allocation2 + $0x2c] sm:$0xf]
    %v827 = vld [vmem:[#allocation2 + $0x30] sm:$0xf]
    %v828 = vld [vmem:[#allocation2 + $0x34] sm:$0xf]
    %v829 = vld [vmem:[#allocation2 + $0x38] sm:$0xf]
    %v830 = vld [vmem:[#allocation2 + $0x3c] sm:$0xf]
    %v831 = vld [vmem:[%s6] sm:$0x1]
    %v833 = vperm.slane %v831, 0
    %v851 = vunpack.c.l.b16 %v815
    %v852 = vunpack.c.l.b16 %v816
    %v853 = vunpack.c.l.b16 %v817
    %v854 = vunpack.c.l.b16 %v818
    %v855 = vunpack.c.l.b16 %v819
    %v856 = vunpack.c.l.b16 %v820
    %v857 = vunpack.c.l.b16 %v821
    %v858 = vunpack.c.l.b16 %v822
    %v859 = vunpack.c.l.b16 %v823
    %v860 = vunpack.c.l.b16 %v824
    %v861 = vunpack.c.l.b16 %v825
    %v862 = vunpack.c.l.b16 %v826
    %v863 = vunpack.c.l.b16 %v827
    %v864 = vunpack.c.l.b16 %v828
    %v865 = vunpack.c.l.b16 %v829
    %v866 = vunpack.c.l.b16 %v830
    %v867 = vpack.c.b16 %v852, %v851
    %v868 = vpack.c.b16 %v854, %v853
    %v869 = vpack.c.b16 %v856, %v855
    %v870 = vpack.c.b16 %v858, %v857
    %v871 = vpack.c.b16 %v860, %v859
    %v872 = vpack.c.b16 %v862, %v861
    %v873 = vpack.c.b16 %v864, %v863
    %v874 = vpack.c.b16 %v866, %v865
    %883 = vmatpush.bf16.msra.mxu0 %v874
    %884 = vmatpush.bf16.msra.mxu0 %v873
    %885 = vmatpush.bf16.msra.mxu0 %v872
    %886 = vmatpush.bf16.msra.mxu0 %v871
    %887 = vmatpush.bf16.msra.mxu0 %v870
    %888 = vmatpush.bf16.msra.mxu0 %v869
    %889 = vmatpush.bf16.msra.mxu0 %v868
    %890 = vmatpush.bf16.msra.mxu0 %v867
    %891 = vmatmul.bf16.gmra.mxu0 %v799
    %v892 = vpop.f32.mrf.mxu0
    %v893 = vadd.f32 %v833, %v892
    %v894 = vpop.f32.mrf.mxu0
    %v895 = vadd.f32 %v833, %v894
    %896 = vmatmul.bf16.gmra.mxu0 %v800
    %v897 = vpop.f32.mrf.mxu0
    %v898 = vadd.f32 %v833, %v897
    %v899 = vpop.f32.mrf.mxu0
    %v900 = vadd.f32 %v833, %v899
    %901 = vmatmul.bf16.gmra.mxu0 %v801
    %v902 = vpop.f32.mrf.mxu0
    %v903 = vadd.f32 %v833, %v902
    %v904 = vpop.f32.mrf.mxu0
    %v905 = vadd.f32 %v833, %v904
    %906 = vmatmul.bf16.gmra.mxu0 %v802
    %v907 = vpop.f32.mrf.mxu0
    %v908 = vadd.f32 %v833, %v907
    %v909 = vpop.f32.mrf.mxu0
    %v910 = vadd.f32 %v833, %v909
    %911 = vmatmul.bf16.gmra.mxu0 %v803
    %v912 = vpop.f32.mrf.mxu0
    %v913 = vadd.f32 %v833, %v912
    %v914 = vpop.f32.mrf.mxu0
    %v915 = vadd.f32 %v833, %v914
    %916 = vmatmul.bf16.gmra.mxu0 %v804
    %v917 = vpop.f32.mrf.mxu0
    %v918 = vadd.f32 %v833, %v917
    %v919 = vpop.f32.mrf.mxu0
    %v920 = vadd.f32 %v833, %v919
    %921 = vmatmul.bf16.gmra.mxu0 %v805
    %v922 = vpop.f32.mrf.mxu0
    %v923 = vadd.f32 %v833, %v922
    %v924 = vpop.f32.mrf.mxu0
    %v925 = vadd.f32 %v833, %v924
    %926 = vmatmul.bf16.gmra.mxu0 %v806
    %v927 = vpop.f32.mrf.mxu0
    %v928 = vadd.f32 %v833, %v927
    %v929 = vpop.f32.mrf.mxu0
    %v930 = vadd.f32 %v833, %v929
    %931 = vmatmul.bf16.gmra.mxu0 %v807
    %v932 = vpop.f32.mrf.mxu0
    %v933 = vadd.f32 %v833, %v932
    %v934 = vpop.f32.mrf.mxu0
    %v935 = vadd.f32 %v833, %v934
    %936 = vmatmul.bf16.gmra.mxu0 %v808
    %v937 = vpop.f32.mrf.mxu0
    %v938 = vadd.f32 %v833, %v937
    %v939 = vpop.f32.mrf.mxu0
    %v940 = vadd.f32 %v833, %v939
    %941 = vmatmul.bf16.gmra.mxu0 %v809
    %v942 = vpop.f32.mrf.mxu0
    %v943 = vadd.f32 %v833, %v942
    %v944 = vpop.f32.mrf.mxu0
    %v945 = vadd.f32 %v833, %v944
    %946 = vmatmul.bf16.gmra.mxu0 %v810
    %v947 = vpop.f32.mrf.mxu0
    %v948 = vadd.f32 %v833, %v947
    %v949 = vpop.f32.mrf.mxu0
    %v950 = vadd.f32 %v833, %v949
    %951 = vmatmul.bf16.gmra.mxu0 %v811
    %v952 = vpop.f32.mrf.mxu0
    %v953 = vadd.f32 %v833, %v952
    %v954 = vpop.f32.mrf.mxu0
    %v955 = vadd.f32 %v833, %v954
    %956 = vmatmul.bf16.gmra.mxu0 %v812
    %v957 = vpop.f32.mrf.mxu0
    %v958 = vadd.f32 %v833, %v957
    %v959 = vpop.f32.mrf.mxu0
    %v960 = vadd.f32 %v833, %v959
    %961 = vmatmul.bf16.gmra.mxu0 %v813
    %v962 = vpop.f32.mrf.mxu0
    %v963 = vadd.f32 %v833, %v962
    %v964 = vpop.f32.mrf.mxu0
    %v965 = vadd.f32 %v833, %v964
    %966 = vmatmul.bf16.gmra.mxu0 %v814
    %v967 = vpop.f32.mrf.mxu0
    %v968 = vadd.f32 %v833, %v967
    %v969 = vpop.f32.mrf.mxu0
    %v970 = vadd.f32 %v833, %v969
    %971 = vdwg.mxu0
    %v972 = vmul.f32 %v893, 0.5
    %v973 = vmul.f32 %v895, 0.5
    %v974 = vmul.f32 %v898, 0.5
    %v975 = vmul.f32 %v900, 0.5
    %v976 = vmul.f32 %v903, 0.5
    %v977 = vmul.f32 %v905, 0.5
    %v978 = vmul.f32 %v908, 0.5
    %v979 = vmul.f32 %v910, 0.5
    %v980 = vmul.f32 %v913, 0.5
    %v981 = vmul.f32 %v915, 0.5
    %v982 = vmul.f32 %v918, 0.5
    %v983 = vmul.f32 %v920, 0.5
    %v984 = vmul.f32 %v923, 0.5
    %v985 = vmul.f32 %v925, 0.5
    %v986 = vmul.f32 %v928, 0.5
    %v987 = vmul.f32 %v930, 0.5
    %v988 = vmul.f32 %v933, 0.5
    %v989 = vmul.f32 %v935, 0.5
    %v990 = vmul.f32 %v938, 0.5
    %v991 = vmul.f32 %v940, 0.5
    %v992 = vmul.f32 %v943, 0.5
    %v993 = vmul.f32 %v945, 0.5
    %v994 = vmul.f32 %v948, 0.5
    %v995 = vmul.f32 %v950, 0.5
    %v996 = vmul.f32 %v953, 0.5
    %v997 = vmul.f32 %v955, 0.5
    %v998 = vmul.f32 %v958, 0.5
    %v999 = vmul.f32 %v960, 0.5
    %v1000 = vmul.f32 %v963, 0.5
    %v1001 = vmul.f32 %v965, 0.5
    %v1002 = vmul.f32 %v968, 0.5
    %v1003 = vmul.f32 %v970, 0.5
    %v1004 = vtanh.pop %v972
    %v1005 = vtanh.pop %v973
    %v1006 = vtanh.pop %v974
    %v1007 = vtanh.pop %v975
    %v1008 = vtanh.pop %v976
    %v1009 = vtanh.pop %v977
    %v1010 = vtanh.pop %v978
    %v1011 = vtanh.pop %v979
    %v1012 = vtanh.pop %v980
    %v1013 = vtanh.pop %v981
    %v1014 = vtanh.pop %v982
    %v1015 = vtanh.pop %v983
    %v1016 = vtanh.pop %v984
    %v1017 = vtanh.pop %v985
    %v1018 = vtanh.pop %v986
    %v1019 = vtanh.pop %v987
    %v1020 = vtanh.pop %v988
    %v1021 = vtanh.pop %v989
    %v1022 = vtanh.pop %v990
    %v1023 = vtanh.pop %v991
    %v1024 = vtanh.pop %v992
    %v1025 = vtanh.pop %v993
    %v1026 = vtanh.pop %v994
    %v1027 = vtanh.pop %v995
    %v1028 = vtanh.pop %v996
    %v1029 = vtanh.pop %v997
    %v1030 = vtanh.pop %v998
    %v1031 = vtanh.pop %v999
    %v1032 = vtanh.pop %v1000
    %v1033 = vtanh.pop %v1001
    %v1034 = vtanh.pop %v1002
    %v1035 = vtanh.pop %v1003
    %v1036 = vmul.f32 %v1004, 0.5
    %v1037 = vmul.f32 %v1005, 0.5
    %v1038 = vmul.f32 %v1006, 0.5
    %v1039 = vmul.f32 %v1007, 0.5
    %v1040 = vmul.f32 %v1008, 0.5
    %v1041 = vmul.f32 %v1009, 0.5
    %v1042 = vmul.f32 %v1010, 0.5
    %v1043 = vmul.f32 %v1011, 0.5
    %v1044 = vmul.f32 %v1012, 0.5
    %v1045 = vmul.f32 %v1013, 0.5
    %v1046 = vmul.f32 %v1014, 0.5
    %v1047 = vmul.f32 %v1015, 0.5
    %v1048 = vmul.f32 %v1016, 0.5
    %v1049 = vmul.f32 %v1017, 0.5
    %v1050 = vmul.f32 %v1018, 0.5
    %v1051 = vmul.f32 %v1019, 0.5
    %v1052 = vmul.f32 %v1020, 0.5
    %v1053 = vmul.f32 %v1021, 0.5
    %v1054 = vmul.f32 %v1022, 0.5
    %v1055 = vmul.f32 %v1023, 0.5
    %v1056 = vmul.f32 %v1024, 0.5
    %v1057 = vmul.f32 %v1025, 0.5
    %v1058 = vmul.f32 %v1026, 0.5
    %v1059 = vmul.f32 %v1027, 0.5
    %v1060 = vmul.f32 %v1028, 0.5
    %v1061 = vmul.f32 %v1029, 0.5
    %v1062 = vmul.f32 %v1030, 0.5
    %v1063 = vmul.f32 %v1031, 0.5
    %v1064 = vmul.f32 %v1032, 0.5
    %v1065 = vmul.f32 %v1033, 0.5
    %v1066 = vmul.f32 %v1034, 0.5
    %v1067 = vmul.f32 %v1035, 0.5
    %v1068 = vadd.f32 %v1036, 0.5
    %v1069 = vadd.f32 %v1037, 0.5
    %v1070 = vadd.f32 %v1038, 0.5
    %v1071 = vadd.f32 %v1039, 0.5
    %v1072 = vadd.f32 %v1040, 0.5
    %v1073 = vadd.f32 %v1041, 0.5
    %v1074 = vadd.f32 %v1042, 0.5
    %v1075 = vadd.f32 %v1043, 0.5
    %v1076 = vadd.f32 %v1044, 0.5
    %v1077 = vadd.f32 %v1045, 0.5
    %v1078 = vadd.f32 %v1046, 0.5
    %v1079 = vadd.f32 %v1047, 0.5
    %v1080 = vadd.f32 %v1048, 0.5
    %v1081 = vadd.f32 %v1049, 0.5
    %v1082 = vadd.f32 %v1050, 0.5
    %v1083 = vadd.f32 %v1051, 0.5
    %v1084 = vadd.f32 %v1052, 0.5
    %v1085 = vadd.f32 %v1053, 0.5
    %v1086 = vadd.f32 %v1054, 0.5
    %v1087 = vadd.f32 %v1055, 0.5
    %v1088 = vadd.f32 %v1056, 0.5
    %v1089 = vadd.f32 %v1057, 0.5
    %v1090 = vadd.f32 %v1058, 0.5
    %v1091 = vadd.f32 %v1059, 0.5
    %v1092 = vadd.f32 %v1060, 0.5
    %v1093 = vadd.f32 %v1061, 0.5
    %v1094 = vadd.f32 %v1062, 0.5
    %v1095 = vadd.f32 %v1063, 0.5
    %v1096 = vadd.f32 %v1064, 0.5
    %v1097 = vadd.f32 %v1065, 0.5
    %v1098 = vadd.f32 %v1066, 0.5
    %v1099 = vadd.f32 %v1067, 0.5
    %v1100 = vpack.c.bf16 %v1069, %v1068
    %v1101 = vpack.c.bf16 %v1071, %v1070
    %v1102 = vpack.c.bf16 %v1073, %v1072
    %v1103 = vpack.c.bf16 %v1075, %v1074
    %v1104 = vpack.c.bf16 %v1077, %v1076
    %v1105 = vpack.c.bf16 %v1079, %v1078
    %v1106 = vpack.c.bf16 %v1081, %v1080
    %v1107 = vpack.c.bf16 %v1083, %v1082
    %v1108 = vpack.c.bf16 %v1085, %v1084
    %v1109 = vpack.c.bf16 %v1087, %v1086
    %v1110 = vpack.c.bf16 %v1089, %v1088
    %v1111 = vpack.c.bf16 %v1091, %v1090
    %v1112 = vpack.c.bf16 %v1093, %v1092
    %v1113 = vpack.c.bf16 %v1095, %v1094
    %v1114 = vpack.c.bf16 %v1097, %v1096
    %v1115 = vpack.c.bf16 %v1099, %v1098
    %v1116 = vld [vmem:[#allocation4] sm:$0xf]
    %v1117 = vld [vmem:[#allocation4 + $0x4] sm:$0xf]
    %v1118 = vld [vmem:[#allocation4 + $0x8] sm:$0xf]
    %v1119 = vld [vmem:[#allocation4 + $0xc] sm:$0xf]
    %v1120 = vld [vmem:[#allocation4 + $0x10] sm:$0xf]
    %v1121 = vld [vmem:[#allocation4 + $0x14] sm:$0xf]
    %v1122 = vld [vmem:[#allocation4 + $0x18] sm:$0xf]
    %v1123 = vld [vmem:[#allocation4 + $0x1c] sm:$0xf]
    %v1124 = vld [vmem:[#allocation4 + $0x20] sm:$0xf]
    %v1125 = vld [vmem:[#allocation4 + $0x24] sm:$0xf]
    %v1126 = vld [vmem:[#allocation4 + $0x28] sm:$0xf]
    %v1127 = vld [vmem:[#allocation4 + $0x2c] sm:$0xf]
    %v1128 = vld [vmem:[#allocation4 + $0x30] sm:$0xf]
    %v1129 = vld [vmem:[#allocation4 + $0x34] sm:$0xf]
    %v1130 = vld [vmem:[#allocation4 + $0x38] sm:$0xf]
    %v1131 = vld [vmem:[#allocation4 + $0x3c] sm:$0xf]
    %v1132 = vld [vmem:[%s8] sm:$0x1]
    %v1134 = vperm.slane %v1132, 0
    %v1152 = vunpack.c.l.b16 %v1116
    %v1153 = vunpack.c.l.b16 %v1117
    %v1154 = vunpack.c.l.b16 %v1118
    %v1155 = vunpack.c.l.b16 %v1119
    %v1156 = vunpack.c.l.b16 %v1120
    %v1157 = vunpack.c.l.b16 %v1121
    %v1158 = vunpack.c.l.b16 %v1122
    %v1159 = vunpack.c.l.b16 %v1123
    %v1160 = vunpack.c.l.b16 %v1124
    %v1161 = vunpack.c.l.b16 %v1125
    %v1162 = vunpack.c.l.b16 %v1126
    %v1163 = vunpack.c.l.b16 %v1127
    %v1164 = vunpack.c.l.b16 %v1128
    %v1165 = vunpack.c.l.b16 %v1129
    %v1166 = vunpack.c.l.b16 %v1130
    %v1167 = vunpack.c.l.b16 %v1131
    %v1168 = vpack.c.b16 %v1153, %v1152
    %v1169 = vpack.c.b16 %v1155, %v1154
    %v1170 = vpack.c.b16 %v1157, %v1156
    %v1171 = vpack.c.b16 %v1159, %v1158
    %v1172 = vpack.c.b16 %v1161, %v1160
    %v1173 = vpack.c.b16 %v1163, %v1162
    %v1174 = vpack.c.b16 %v1165, %v1164
    %v1175 = vpack.c.b16 %v1167, %v1166
    %1184 = vmatpush.bf16.msra.mxu0 %v1175
    %1185 = vmatpush.bf16.msra.mxu0 %v1174
    %1186 = vmatpush.bf16.msra.mxu0 %v1173
    %1187 = vmatpush.bf16.msra.mxu0 %v1172
    %1188 = vmatpush.bf16.msra.mxu0 %v1171
    %1189 = vmatpush.bf16.msra.mxu0 %v1170
    %1190 = vmatpush.bf16.msra.mxu0 %v1169
    %1191 = vmatpush.bf16.msra.mxu0 %v1168
    %1192 = vmatmul.bf16.gmra.mxu0 %v1100
    %v1193 = vpop.f32.mrf.mxu0
    %v1194 = vadd.f32 %v1134, %v1193
    %v1195 = vpop.f32.mrf.mxu0
    %v1196 = vadd.f32 %v1134, %v1195
    %1197 = vmatmul.bf16.gmra.mxu0 %v1101
    %v1198 = vpop.f32.mrf.mxu0
    %v1199 = vadd.f32 %v1134, %v1198
    %v1200 = vpop.f32.mrf.mxu0
    %v1201 = vadd.f32 %v1134, %v1200
    %1202 = vmatmul.bf16.gmra.mxu0 %v1102
    %v1203 = vpop.f32.mrf.mxu0
    %v1204 = vadd.f32 %v1134, %v1203
    %v1205 = vpop.f32.mrf.mxu0
    %v1206 = vadd.f32 %v1134, %v1205
    %1207 = vmatmul.bf16.gmra.mxu0 %v1103
    %v1208 = vpop.f32.mrf.mxu0
    %v1209 = vadd.f32 %v1134, %v1208
    %v1210 = vpop.f32.mrf.mxu0
    %v1211 = vadd.f32 %v1134, %v1210
    %1212 = vmatmul.bf16.gmra.mxu0 %v1104
    %v1213 = vpop.f32.mrf.mxu0
    %v1214 = vadd.f32 %v1134, %v1213
    %v1215 = vpop.f32.mrf.mxu0
    %v1216 = vadd.f32 %v1134, %v1215
    %1217 = vmatmul.bf16.gmra.mxu0 %v1105
    %v1218 = vpop.f32.mrf.mxu0
    %v1219 = vadd.f32 %v1134, %v1218
    %v1220 = vpop.f32.mrf.mxu0
    %v1221 = vadd.f32 %v1134, %v1220
    %1222 = vmatmul.bf16.gmra.mxu0 %v1106
    %v1223 = vpop.f32.mrf.mxu0
    %v1224 = vadd.f32 %v1134, %v1223
    %v1225 = vpop.f32.mrf.mxu0
    %v1226 = vadd.f32 %v1134, %v1225
    %1227 = vmatmul.bf16.gmra.mxu0 %v1107
    %v1228 = vpop.f32.mrf.mxu0
    %v1229 = vadd.f32 %v1134, %v1228
    %v1230 = vpop.f32.mrf.mxu0
    %v1231 = vadd.f32 %v1134, %v1230
    %1232 = vmatmul.bf16.gmra.mxu0 %v1108
    %v1233 = vpop.f32.mrf.mxu0
    %v1234 = vadd.f32 %v1134, %v1233
    %v1235 = vpop.f32.mrf.mxu0
    %v1236 = vadd.f32 %v1134, %v1235
    %1237 = vmatmul.bf16.gmra.mxu0 %v1109
    %v1238 = vpop.f32.mrf.mxu0
    %v1239 = vadd.f32 %v1134, %v1238
    %v1240 = vpop.f32.mrf.mxu0
    %v1241 = vadd.f32 %v1134, %v1240
    %1242 = vmatmul.bf16.gmra.mxu0 %v1110
    %v1243 = vpop.f32.mrf.mxu0
    %v1244 = vadd.f32 %v1134, %v1243
    %v1245 = vpop.f32.mrf.mxu0
    %v1246 = vadd.f32 %v1134, %v1245
    %1247 = vmatmul.bf16.gmra.mxu0 %v1111
    %v1248 = vpop.f32.mrf.mxu0
    %v1249 = vadd.f32 %v1134, %v1248
    %v1250 = vpop.f32.mrf.mxu0
    %v1251 = vadd.f32 %v1134, %v1250
    %1252 = vmatmul.bf16.gmra.mxu0 %v1112
    %v1253 = vpop.f32.mrf.mxu0
    %v1254 = vadd.f32 %v1134, %v1253
    %v1255 = vpop.f32.mrf.mxu0
    %v1256 = vadd.f32 %v1134, %v1255
    %1257 = vmatmul.bf16.gmra.mxu0 %v1113
    %v1258 = vpop.f32.mrf.mxu0
    %v1259 = vadd.f32 %v1134, %v1258
    %v1260 = vpop.f32.mrf.mxu0
    %v1261 = vadd.f32 %v1134, %v1260
    %1262 = vmatmul.bf16.gmra.mxu0 %v1114
    %v1263 = vpop.f32.mrf.mxu0
    %v1264 = vadd.f32 %v1134, %v1263
    %v1265 = vpop.f32.mrf.mxu0
    %v1266 = vadd.f32 %v1134, %v1265
    %1267 = vmatmul.bf16.gmra.mxu0 %v1115
    %v1268 = vpop.f32.mrf.mxu0
    %v1269 = vadd.f32 %v1134, %v1268
    %v1270 = vpop.f32.mrf.mxu0
    %v1271 = vadd.f32 %v1134, %v1270
    %1272 = vdwg.mxu0
    %v1273 = vmul.f32 %v1194, 0.5
    %v1274 = vmul.f32 %v1196, 0.5
    %v1275 = vmul.f32 %v1199, 0.5
    %v1276 = vmul.f32 %v1201, 0.5
    %v1277 = vmul.f32 %v1204, 0.5
    %v1278 = vmul.f32 %v1206, 0.5
    %v1279 = vmul.f32 %v1209, 0.5
    %v1280 = vmul.f32 %v1211, 0.5
    %v1281 = vmul.f32 %v1214, 0.5
    %v1282 = vmul.f32 %v1216, 0.5
    %v1283 = vmul.f32 %v1219, 0.5
    %v1284 = vmul.f32 %v1221, 0.5
    %v1285 = vmul.f32 %v1224, 0.5
    %v1286 = vmul.f32 %v1226, 0.5
    %v1287 = vmul.f32 %v1229, 0.5
    %v1288 = vmul.f32 %v1231, 0.5
    %v1289 = vmul.f32 %v1234, 0.5
    %v1290 = vmul.f32 %v1236, 0.5
    %v1291 = vmul.f32 %v1239, 0.5
    %v1292 = vmul.f32 %v1241, 0.5
    %v1293 = vmul.f32 %v1244, 0.5
    %v1294 = vmul.f32 %v1246, 0.5
    %v1295 = vmul.f32 %v1249, 0.5
    %v1296 = vmul.f32 %v1251, 0.5
    %v1297 = vmul.f32 %v1254, 0.5
    %v1298 = vmul.f32 %v1256, 0.5
    %v1299 = vmul.f32 %v1259, 0.5
    %v1300 = vmul.f32 %v1261, 0.5
    %v1301 = vmul.f32 %v1264, 0.5
    %v1302 = vmul.f32 %v1266, 0.5
    %v1303 = vmul.f32 %v1269, 0.5
    %v1304 = vmul.f32 %v1271, 0.5
    %v1305 = vtanh.pop %v1273
    %v1306 = vtanh.pop %v1274
    %v1307 = vtanh.pop %v1275
    %v1308 = vtanh.pop %v1276
    %v1309 = vtanh.pop %v1277
    %v1310 = vtanh.pop %v1278
    %v1311 = vtanh.pop %v1279
    %v1312 = vtanh.pop %v1280
    %v1313 = vtanh.pop %v1281
    %v1314 = vtanh.pop %v1282
    %v1315 = vtanh.pop %v1283
    %v1316 = vtanh.pop %v1284
    %v1317 = vtanh.pop %v1285
    %v1318 = vtanh.pop %v1286
    %v1319 = vtanh.pop %v1287
    %v1320 = vtanh.pop %v1288
    %v1321 = vtanh.pop %v1289
    %v1322 = vtanh.pop %v1290
    %v1323 = vtanh.pop %v1291
    %v1324 = vtanh.pop %v1292
    %v1325 = vtanh.pop %v1293
    %v1326 = vtanh.pop %v1294
    %v1327 = vtanh.pop %v1295
    %v1328 = vtanh.pop %v1296
    %v1329 = vtanh.pop %v1297
    %v1330 = vtanh.pop %v1298
    %v1331 = vtanh.pop %v1299
    %v1332 = vtanh.pop %v1300
    %v1333 = vtanh.pop %v1301
    %v1334 = vtanh.pop %v1302
    %v1335 = vtanh.pop %v1303
    %v1336 = vtanh.pop %v1304
    %v1337 = vmul.f32 %v1305, 0.5
    %v1338 = vmul.f32 %v1306, 0.5
    %v1339 = vmul.f32 %v1307, 0.5
    %v1340 = vmul.f32 %v1308, 0.5
    %v1341 = vmul.f32 %v1309, 0.5
    %v1342 = vmul.f32 %v1310, 0.5
    %v1343 = vmul.f32 %v1311, 0.5
    %v1344 = vmul.f32 %v1312, 0.5
    %v1345 = vmul.f32 %v1313, 0.5
    %v1346 = vmul.f32 %v1314, 0.5
    %v1347 = vmul.f32 %v1315, 0.5
    %v1348 = vmul.f32 %v1316, 0.5
    %v1349 = vmul.f32 %v1317, 0.5
    %v1350 = vmul.f32 %v1318, 0.5
    %v1351 = vmul.f32 %v1319, 0.5
    %v1352 = vmul.f32 %v1320, 0.5
    %v1353 = vmul.f32 %v1321, 0.5
    %v1354 = vmul.f32 %v1322, 0.5
    %v1355 = vmul.f32 %v1323, 0.5
    %v1356 = vmul.f32 %v1324, 0.5
    %v1357 = vmul.f32 %v1325, 0.5
    %v1358 = vmul.f32 %v1326, 0.5
    %v1359 = vmul.f32 %v1327, 0.5
    %v1360 = vmul.f32 %v1328, 0.5
    %v1361 = vmul.f32 %v1329, 0.5
    %v1362 = vmul.f32 %v1330, 0.5
    %v1363 = vmul.f32 %v1331, 0.5
    %v1364 = vmul.f32 %v1332, 0.5
    %v1365 = vmul.f32 %v1333, 0.5
    %v1366 = vmul.f32 %v1334, 0.5
    %v1367 = vmul.f32 %v1335, 0.5
    %v1368 = vmul.f32 %v1336, 0.5
    %v1369 = vadd.f32 %v1337, 0.5
    %v1370 = vadd.f32 %v1338, 0.5
    %v1371 = vadd.f32 %v1339, 0.5
    %v1372 = vadd.f32 %v1340, 0.5
    %v1373 = vadd.f32 %v1341, 0.5
    %v1374 = vadd.f32 %v1342, 0.5
    %v1375 = vadd.f32 %v1343, 0.5
    %v1376 = vadd.f32 %v1344, 0.5
    %v1377 = vadd.f32 %v1345, 0.5
    %v1378 = vadd.f32 %v1346, 0.5
    %v1379 = vadd.f32 %v1347, 0.5
    %v1380 = vadd.f32 %v1348, 0.5
    %v1381 = vadd.f32 %v1349, 0.5
    %v1382 = vadd.f32 %v1350, 0.5
    %v1383 = vadd.f32 %v1351, 0.5
    %v1384 = vadd.f32 %v1352, 0.5
    %v1385 = vadd.f32 %v1353, 0.5
    %v1386 = vadd.f32 %v1354, 0.5
    %v1387 = vadd.f32 %v1355, 0.5
    %v1388 = vadd.f32 %v1356, 0.5
    %v1389 = vadd.f32 %v1357, 0.5
    %v1390 = vadd.f32 %v1358, 0.5
    %v1391 = vadd.f32 %v1359, 0.5
    %v1392 = vadd.f32 %v1360, 0.5
    %v1393 = vadd.f32 %v1361, 0.5
    %v1394 = vadd.f32 %v1362, 0.5
    %v1395 = vadd.f32 %v1363, 0.5
    %v1396 = vadd.f32 %v1364, 0.5
    %v1397 = vadd.f32 %v1365, 0.5
    %v1398 = vadd.f32 %v1366, 0.5
    %v1399 = vadd.f32 %v1367, 0.5
    %v1400 = vadd.f32 %v1368, 0.5
    %v1401 = vpack.c.bf16 %v1370, %v1369
    %v1402 = vpack.c.bf16 %v1372, %v1371
    %v1403 = vpack.c.bf16 %v1374, %v1373
    %v1404 = vpack.c.bf16 %v1376, %v1375
    %v1405 = vpack.c.bf16 %v1378, %v1377
    %v1406 = vpack.c.bf16 %v1380, %v1379
    %v1407 = vpack.c.bf16 %v1382, %v1381
    %v1408 = vpack.c.bf16 %v1384, %v1383
    %v1409 = vpack.c.bf16 %v1386, %v1385
    %v1410 = vpack.c.bf16 %v1388, %v1387
    %v1411 = vpack.c.bf16 %v1390, %v1389
    %v1412 = vpack.c.bf16 %v1392, %v1391
    %v1413 = vpack.c.bf16 %v1394, %v1393
    %v1414 = vpack.c.bf16 %v1396, %v1395
    %v1415 = vpack.c.bf16 %v1398, %v1397
    %v1416 = vpack.c.bf16 %v1400, %v1399
    %v1417 = vld [vmem:[#allocation6] sm:$0xf]
    %v1418 = vld [vmem:[#allocation6 + $0x4] sm:$0xf]
    %v1419 = vld [vmem:[#allocation6 + $0x8] sm:$0xf]
    %v1420 = vld [vmem:[#allocation6 + $0xc] sm:$0xf]
    %v1421 = vld [vmem:[#allocation6 + $0x10] sm:$0xf]
    %v1422 = vld [vmem:[#allocation6 + $0x14] sm:$0xf]
    %v1423 = vld [vmem:[#allocation6 + $0x18] sm:$0xf]
    %v1424 = vld [vmem:[#allocation6 + $0x1c] sm:$0xf]
    %v1425 = vld [vmem:[#allocation6 + $0x20] sm:$0xf]
    %v1426 = vld [vmem:[#allocation6 + $0x24] sm:$0xf]
    %v1427 = vld [vmem:[#allocation6 + $0x28] sm:$0xf]
    %v1428 = vld [vmem:[#allocation6 + $0x2c] sm:$0xf]
    %v1429 = vld [vmem:[#allocation6 + $0x30] sm:$0xf]
    %v1430 = vld [vmem:[#allocation6 + $0x34] sm:$0xf]
    %v1431 = vld [vmem:[#allocation6 + $0x38] sm:$0xf]
    %v1432 = vld [vmem:[#allocation6 + $0x3c] sm:$0xf]
    %v1433 = vld [vmem:[%s10] sm:$0x1]
    %v1435 = vperm.slane %v1433, 0
    %v1453 = vunpack.c.l.b16 %v1417
    %v1454 = vunpack.c.l.b16 %v1418
    %v1455 = vunpack.c.l.b16 %v1419
    %v1456 = vunpack.c.l.b16 %v1420
    %v1457 = vunpack.c.l.b16 %v1421
    %v1458 = vunpack.c.l.b16 %v1422
    %v1459 = vunpack.c.l.b16 %v1423
    %v1460 = vunpack.c.l.b16 %v1424
    %v1461 = vunpack.c.l.b16 %v1425
    %v1462 = vunpack.c.l.b16 %v1426
    %v1463 = vunpack.c.l.b16 %v1427
    %v1464 = vunpack.c.l.b16 %v1428
    %v1465 = vunpack.c.l.b16 %v1429
    %v1466 = vunpack.c.l.b16 %v1430
    %v1467 = vunpack.c.l.b16 %v1431
    %v1468 = vunpack.c.l.b16 %v1432
    %v1469 = vpack.c.b16 %v1454, %v1453
    %v1470 = vpack.c.b16 %v1456, %v1455
    %v1471 = vpack.c.b16 %v1458, %v1457
    %v1472 = vpack.c.b16 %v1460, %v1459
    %v1473 = vpack.c.b16 %v1462, %v1461
    %v1474 = vpack.c.b16 %v1464, %v1463
    %v1475 = vpack.c.b16 %v1466, %v1465
    %v1476 = vpack.c.b16 %v1468, %v1467
    %1485 = vmatpush.bf16.msra.mxu0 %v1476
    %1486 = vmatpush.bf16.msra.mxu0 %v1475
    %1487 = vmatpush.bf16.msra.mxu0 %v1474
    %1488 = vmatpush.bf16.msra.mxu0 %v1473
    %1489 = vmatpush.bf16.msra.mxu0 %v1472
    %1490 = vmatpush.bf16.msra.mxu0 %v1471
    %1491 = vmatpush.bf16.msra.mxu0 %v1470
    %1492 = vmatpush.bf16.msra.mxu0 %v1469
    %1493 = vmatmul.bf16.gmra.mxu0 %v1401
    %v1494 = vpop.f32.mrf.mxu0
    %v1495 = vadd.f32 %v1435, %v1494
    %v1496 = vpop.f32.mrf.mxu0
    %v1497 = vadd.f32 %v1435, %v1496
    %1498 = vmatmul.bf16.gmra.mxu0 %v1402
    %v1499 = vpop.f32.mrf.mxu0
    %v1500 = vadd.f32 %v1435, %v1499
    %v1501 = vpop.f32.mrf.mxu0
    %v1502 = vadd.f32 %v1435, %v1501
    %1503 = vmatmul.bf16.gmra.mxu0 %v1403
    %v1504 = vpop.f32.mrf.mxu0
    %v1505 = vadd.f32 %v1435, %v1504
    %v1506 = vpop.f32.mrf.mxu0
    %v1507 = vadd.f32 %v1435, %v1506
    %1508 = vmatmul.bf16.gmra.mxu0 %v1404
    %v1509 = vpop.f32.mrf.mxu0
    %v1510 = vadd.f32 %v1435, %v1509
    %v1511 = vpop.f32.mrf.mxu0
    %v1512 = vadd.f32 %v1435, %v1511
    %1513 = vmatmul.bf16.gmra.mxu0 %v1405
    %v1514 = vpop.f32.mrf.mxu0
    %v1515 = vadd.f32 %v1435, %v1514
    %v1516 = vpop.f32.mrf.mxu0
    %v1517 = vadd.f32 %v1435, %v1516
    %1518 = vmatmul.bf16.gmra.mxu0 %v1406
    %v1519 = vpop.f32.mrf.mxu0
    %v1520 = vadd.f32 %v1435, %v1519
    %v1521 = vpop.f32.mrf.mxu0
    %v1522 = vadd.f32 %v1435, %v1521
    %1523 = vmatmul.bf16.gmra.mxu0 %v1407
    %v1524 = vpop.f32.mrf.mxu0
    %v1525 = vadd.f32 %v1435, %v1524
    %v1526 = vpop.f32.mrf.mxu0
    %v1527 = vadd.f32 %v1435, %v1526
    %1528 = vmatmul.bf16.gmra.mxu0 %v1408
    %v1529 = vpop.f32.mrf.mxu0
    %v1530 = vadd.f32 %v1435, %v1529
    %v1531 = vpop.f32.mrf.mxu0
    %v1532 = vadd.f32 %v1435, %v1531
    %1533 = vmatmul.bf16.gmra.mxu0 %v1409
    %v1534 = vpop.f32.mrf.mxu0
    %v1535 = vadd.f32 %v1435, %v1534
    %v1536 = vpop.f32.mrf.mxu0
    %v1537 = vadd.f32 %v1435, %v1536
    %1538 = vmatmul.bf16.gmra.mxu0 %v1410
    %v1539 = vpop.f32.mrf.mxu0
    %v1540 = vadd.f32 %v1435, %v1539
    %v1541 = vpop.f32.mrf.mxu0
    %v1542 = vadd.f32 %v1435, %v1541
    %1543 = vmatmul.bf16.gmra.mxu0 %v1411
    %v1544 = vpop.f32.mrf.mxu0
    %v1545 = vadd.f32 %v1435, %v1544
    %v1546 = vpop.f32.mrf.mxu0
    %v1547 = vadd.f32 %v1435, %v1546
    %1548 = vmatmul.bf16.gmra.mxu0 %v1412
    %v1549 = vpop.f32.mrf.mxu0
    %v1550 = vadd.f32 %v1435, %v1549
    %v1551 = vpop.f32.mrf.mxu0
    %v1552 = vadd.f32 %v1435, %v1551
    %1553 = vmatmul.bf16.gmra.mxu0 %v1413
    %v1554 = vpop.f32.mrf.mxu0
    %v1555 = vadd.f32 %v1435, %v1554
    %v1556 = vpop.f32.mrf.mxu0
    %v1557 = vadd.f32 %v1435, %v1556
    %1558 = vmatmul.bf16.gmra.mxu0 %v1414
    %v1559 = vpop.f32.mrf.mxu0
    %v1560 = vadd.f32 %v1435, %v1559
    %v1561 = vpop.f32.mrf.mxu0
    %v1562 = vadd.f32 %v1435, %v1561
    %1563 = vmatmul.bf16.gmra.mxu0 %v1415
    %v1564 = vpop.f32.mrf.mxu0
    %v1565 = vadd.f32 %v1435, %v1564
    %v1566 = vpop.f32.mrf.mxu0
    %v1567 = vadd.f32 %v1435, %v1566
    %1568 = vmatmul.bf16.gmra.mxu0 %v1416
    %v1569 = vpop.f32.mrf.mxu0
    %v1570 = vadd.f32 %v1435, %v1569
    %v1571 = vpop.f32.mrf.mxu0
    %v1572 = vadd.f32 %v1435, %v1571
    %1573 = vdwg.mxu0
    %1574 = vst [vmem:[%s11] sm:$0xff] %v1495
    %1575 = vst [vmem:[%s11 + $0x8] sm:$0xff] %v1497
    %1576 = vst [vmem:[%s11 + $0x10] sm:$0xff] %v1500
    %1577 = vst [vmem:[%s11 + $0x18] sm:$0xff] %v1502
    %1578 = vst [vmem:[%s11 + $0x20] sm:$0xff] %v1505
    %1579 = vst [vmem:[%s11 + $0x28] sm:$0xff] %v1507
    %1580 = vst [vmem:[%s11 + $0x30] sm:$0xff] %v1510
    %1581 = vst [vmem:[%s11 + $0x38] sm:$0xff] %v1512
    %1582 = vst [vmem:[%s11 + $0x40] sm:$0xff] %v1515
    %1583 = vst [vmem:[%s11 + $0x48] sm:$0xff] %v1517
    %1584 = vst [vmem:[%s11 + $0x50] sm:$0xff] %v1520
    %1585 = vst [vmem:[%s11 + $0x58] sm:$0xff] %v1522
    %1586 = vst [vmem:[%s11 + $0x60] sm:$0xff] %v1525
    %1587 = vst [vmem:[%s11 + $0x68] sm:$0xff] %v1527
    %1588 = vst [vmem:[%s11 + $0x70] sm:$0xff] %v1530
    %1589 = vst [vmem:[%s11 + $0x78] sm:$0xff] %v1532
    %1590 = vst [vmem:[%s11 + $0x80] sm:$0xff] %v1535
    %1591 = vst [vmem:[%s11 + $0x88] sm:$0xff] %v1537
    %1592 = vst [vmem:[%s11 + $0x90] sm:$0xff] %v1540
    %1593 = vst [vmem:[%s11 + $0x98] sm:$0xff] %v1542
    %1594 = vst [vmem:[%s11 + $0xa0] sm:$0xff] %v1545
    %1595 = vst [vmem:[%s11 + $0xa8] sm:$0xff] %v1547
    %1596 = vst [vmem:[%s11 + $0xb0] sm:$0xff] %v1550
    %1597 = vst [vmem:[%s11 + $0xb8] sm:$0xff] %v1552
    %1598 = vst [vmem:[%s11 + $0xc0] sm:$0xff] %v1555
    %1599 = vst [vmem:[%s11 + $0xc8] sm:$0xff] %v1557
    %1600 = vst [vmem:[%s11 + $0xd0] sm:$0xff] %v1560
    %1601 = vst [vmem:[%s11 + $0xd8] sm:$0xff] %v1562
    %1602 = vst [vmem:[%s11 + $0xe0] sm:$0xff] %v1565
    %1603 = vst [vmem:[%s11 + $0xe8] sm:$0xff] %v1567
    %1604 = vst [vmem:[%s11 + $0xf0] sm:$0xff] %v1570
    %1605 = vst [vmem:[%s11 + $0xf8] sm:$0xff] %v1572
    // Predicated region
    $region58: #{dnn_forward.1} parent=1 // pred_check
      _
    $region59: #{dnn_forward.1} parent=1 // pred_check_branch
      %1607 = sbr.rel (0) target = $region61
    $region60: #{dnn_forward.1} parent=1 // pred_region
      _
    $region61: #{dnn_forward.1} parent=1 // pred_fallthru
      _
    // Predicated region
    $region62: #{dnn_forward.1} parent=1 // pred_check
      _
    $region63: #{dnn_forward.1} parent=1 // pred_check_branch
      %1609 = sbr.rel (0) target = $region65
    $region64: #{dnn_forward.1} parent=1 // pred_region
      _
    $region65: #{dnn_forward.1} parent=1 // pred_fallthru
      _
    %1610 = vsyncpa [#allocation3], 1
    %1611 = vsyncpa [#allocation5], 1

</llo_original>
